<compile_context>
chip_gen: v5e
topology: v5e:2x2
jax: 0.10.0
libtpu: 0.0.40
codegen_flags: <defaults>
</compile_context>

<pallas_src>
import functools

import jax
import jax.numpy as jnp
from jax.experimental import pallas as pl
from jax.experimental.pallas import tpu as pltpu

# ---- small synthetic "bert-base-uncased"-style config -----------------------
VOCAB = 128
MAX_POS = 64
TYPE_VOCAB = 2
HIDDEN = 32
N_LAYERS = 2
N_HEADS = 2
HEAD_DIM = HIDDEN // N_HEADS
INTERMEDIATE = 4 * HIDDEN
NUM_LABELS = 11
CLS_PAD = 128                       # lane-dense classifier slab
LN_EPS = 1e-12

# packed-slab layout constants
WSLAB_COLS = 4 * HIDDEN + INTERMEDIATE            # 256: [wqkv 0:96 | wo 96:128 | wi 128:256]
ROW_EMB_G, ROW_EMB_B = 0, 1
ROW_POOL_B = 2 + 8 * N_LAYERS
ROW_CLS_B = ROW_POOL_B + 1
VEC_ROWS = ROW_CLS_B + 1


def _lrow(l, j):
    # per-layer vector rows: 0 bqkv, 1 bo, 2 ln1_g, 3 ln1_b, 4 bi, 5 bf, 6 ln2_g, 7 ln2_b
    return 2 + 8 * l + j


def _layer_norm(x, g, b):
    mean = jnp.mean(x, axis=-1, keepdims=True)
    var = jnp.mean((x - mean) ** 2, axis=-1, keepdims=True)
    return (x - mean) * jax.lax.rsqrt(var + LN_EPS) * g + b


def _gelu_tanh(x):
    # TODO(synk): HF BERT's default 'gelu' is the exact erf variant; tanh approx
    # is kept for guaranteed TPU EUP lowering (negligible numeric difference).
    c = jnp.float32(0.7978845608028654)  # sqrt(2/pi)
    return 0.5 * x * (1.0 + jnp.tanh(c * (x + 0.044715 * x * x * x)))


# =========================== single fused Pallas kernel =======================

def _fused_bert_kernel(ids_ref, mask_ref, wemb_ref, postype_ref,
                       wslab_ref, wf_ref, vec_ref,
                       out_ref, ctx_ref, *, batch, seq):
    bs = batch * seq
    f32 = jnp.float32
    bf16 = jnp.bfloat16

    def vrow(r, n):                                   # (1, n) f32 bias / LN vector
        return vec_ref[r:r + 1, 0:n]

    # ---- embeddings: one-hot MXU gather + broadcast (pos+type) + LayerNorm ----
    ids = ids_ref[...]                                              # (BS, 1) int32
    iota = jax.lax.broadcasted_iota(jnp.int32, (bs, VOCAB), 1)
    onehot = (iota == ids).astype(bf16)                             # (BS, VOCAB)
    word = jnp.dot(onehot, wemb_ref[...], preferred_element_type=f32)   # (BS, H)
    emb = (word.reshape(batch, seq, HIDDEN)
           + postype_ref[...][None, :, :]).reshape(bs, HIDDEN)
    h = _layer_norm(emb, vrow(ROW_EMB_G, HIDDEN), vrow(ROW_EMB_B, HIDDEN))

    # additive attention-mask bias (1/sqrt(d) already folded into Q weights)
    bias = (1.0 - mask_ref[...]) * jnp.float32(-10000.0)            # (B, S)

    for l in range(N_LAYERS):
        w_l = wslab_ref[l]                                          # (H, 256) bf16
        wqkv = w_l[:, 0:3 * HIDDEN]
        wo = w_l[:, 3 * HIDDEN:4 * HIDDEN]
        wi = w_l[:, 4 * HIDDEN:4 * HIDDEN + INTERMEDIATE]

        # fused QKV projection: bf16 x bf16 -> f32 accumulate
        qkv = jnp.dot(h.astype(bf16), wqkv,
                      preferred_element_type=f32) + vrow(_lrow(l, 0), 3 * HIDDEN)
        q = qkv[:, 0 * HIDDEN:1 * HIDDEN]
        k = qkv[:, 1 * HIDDEN:2 * HIDDEN]
        v = qkv[:, 2 * HIDDEN:3 * HIDDEN]

        # attention: per-(batch, head) tiles written straight into VMEM scratch
        for b in range(batch):
            r0 = b * seq
            bias_b = bias[b:b + 1, :]                               # (1, S)
            for hh in range(N_HEADS):
                c0 = hh * HEAD_DIM
                q_bh = q[r0:r0 + seq, c0:c0 + HEAD_DIM]
                k_bh = k[r0:r0 + seq, c0:c0 + HEAD_DIM]
                v_bh = v[r0:r0 + seq, c0:c0 + HEAD_DIM]
                s_bh = jnp.dot(q_bh, k_bh.T, preferred_element_type=f32) + bias_b
                p_bh = jnp.exp(s_bh - jnp.max(s_bh, axis=-1, keepdims=True))
                p_bh = p_bh / jnp.sum(p_bh, axis=-1, keepdims=True)   # exact softmax
                ctx_ref[r0:r0 + seq, c0:c0 + HEAD_DIM] = jnp.dot(
                    p_bh, v_bh, preferred_element_type=f32)
        ctx = ctx_ref[...]                                          # (BS, H) f32

        # output projection + residual + LayerNorm (fused epilogue)
        attn = jnp.dot(ctx.astype(bf16), wo,
                       preferred_element_type=f32) + vrow(_lrow(l, 1), HIDDEN)
        h1 = _layer_norm(attn + h, vrow(_lrow(l, 2), HIDDEN), vrow(_lrow(l, 3), HIDDEN))

        # FFN: intermediate + fused GELU, then output + residual + LayerNorm
        inter = jnp.dot(h1.astype(bf16), wi,
                        preferred_element_type=f32) + vrow(_lrow(l, 4), INTERMEDIATE)
        inter = _gelu_tanh(inter)
        ffn = jnp.dot(inter.astype(bf16), wf_ref[l],
                      preferred_element_type=f32) + vrow(_lrow(l, 5), HIDDEN)
        h = _layer_norm(ffn + h1, vrow(_lrow(l, 6), HIDDEN), vrow(_lrow(l, 7), HIDDEN))

    # ---- fused tail: pooler (CLS token) + classifier + log_softmax ----
    cls_rows = h.reshape(batch, seq, HIDDEN)[:, 0, :]               # (B, H)
    w_t = wslab_ref[N_LAYERS]                                       # (H, 256) bf16
    pool_w = w_t[:, 0:HIDDEN]
    cls_w = w_t[:, HIDDEN:HIDDEN + CLS_PAD]
    pooled = jnp.tanh(jnp.dot(cls_rows.astype(bf16), pool_w,
                              preferred_element_type=f32) + vrow(ROW_POOL_B, HIDDEN))
    # padded classifier columns carry a -1e30 f32 bias -> vanish from logsumexp
    logits = jnp.dot(pooled.astype(bf16), cls_w,
                     preferred_element_type=f32) + vrow(ROW_CLS_B, CLS_PAD)
    m = jnp.max(logits, axis=-1, keepdims=True)
    s = logits - m
    lse = jnp.log(jnp.sum(jnp.exp(s), axis=-1, keepdims=True))
    out_ref[...] = (s - lse).astype(out_ref.dtype)


def _full_spec(shape):
    zeros = (0,) * len(shape)
    return pl.BlockSpec(shape, lambda i, _z=zeros: _z)


def my_model_forward(packed, x2, x3):
    """packed: pre-packed parameter slabs; x2: token ids (B,S); x3: mask (B,S)."""
    ids = x2.astype(jnp.int32)       # torch does .to(int64); int32 suffices here
    B, S = ids.shape
    assert S <= MAX_POS, "sequence length exceeds position-embedding table"
    mask = x3.astype(jnp.float32)
    pos_type = packed["pos_type"][:S]                # (S, H) f32, static slice

    inputs = (
        ids.reshape(B * S, 1),
        mask,
        packed["word_emb"],          # (VOCAB, H)      bf16
        pos_type,                    # (S, H)          f32
        packed["wslab"],             # (L+1, H, 256)   bf16
        packed["wf"],                # (L, I, H)       bf16
        packed["vecs"],              # (VEC_ROWS, 128) f32
    )

    out_pad = pl.pallas_call(
        functools.partial(_fused_bert_kernel, batch=B, seq=S),
        out_shape=jax.ShapeDtypeStruct((B, CLS_PAD), jnp.float32),
        grid=(1,),
        in_specs=[_full_spec(a.shape) for a in inputs],
        out_specs=_full_spec((B, CLS_PAD)),
        scratch_shapes=[pltpu.VMEM((B * S, HIDDEN), jnp.float32)],   # attention ctx
        compiler_params=pltpu.CompilerParams(
            dimension_semantics=("arbitrary",)),   # tiny grid: no megacore sharding
    )(*inputs)
    return out_pad[:, :NUM_LABELS]                 # LogSoftmax(dim=1) over 11 labels


# ============================ parameter construction ==========================

def _nrm(key, shape):
    return 0.02 * jax.random.normal(key, shape, dtype=jnp.float32)


def init_params(key):
    """Raw (HF-checkpoint-like) params: matmul weights bf16, vectors f32."""
    keys = iter(jax.random.split(key, 16))
    nxt = lambda: next(keys)
    f32, bf16 = jnp.float32, jnp.bfloat16
    L, H, I = N_LAYERS, HIDDEN, INTERMEDIATE
    return {
        "word_emb": _nrm(nxt(), (VOCAB, H)).astype(bf16),
        "pos_emb": _nrm(nxt(), (MAX_POS, H)),
        "type_emb": _nrm(nxt(), (TYPE_VOCAB, H)),
        "emb_ln_g": jnp.ones((1, H), f32),
        "emb_ln_b": jnp.zeros((1, H), f32),
        "wqkv": _nrm(nxt(), (L, H, 3 * H)).astype(bf16),
        "bqkv": jnp.zeros((L, 1, 3 * H), f32),
        "wo": _nrm(nxt(), (L, H, H)).astype(bf16),
        "bo": jnp.zeros((L, 1, H), f32),
        "ln1_g": jnp.ones((L, 1, H), f32),
        "ln1_b": jnp.zeros((L, 1, H), f32),
        "wi": _nrm(nxt(), (L, H, I)).astype(bf16),
        "bi": jnp.zeros((L, 1, I), f32),
        "wf": _nrm(nxt(), (L, I, H)).astype(bf16),
        "bf": jnp.zeros((L, 1, H), f32),
        "ln2_g": jnp.ones((L, 1, H), f32),
        "ln2_b": jnp.zeros((L, 1, H), f32),
        "pool_w": _nrm(nxt(), (H, H)).astype(bf16),
        "pool_b": jnp.zeros((1, H), f32),
        "cls_w": _nrm(nxt(), (H, NUM_LABELS)).astype(bf16),
        "cls_b": jnp.zeros((1, NUM_LABELS), f32),
    }


def pack_params(p):
    """One-time packing of raw params into the kernel's contiguous slabs."""
    f32, bf16 = jnp.float32, jnp.bfloat16
    L, H, I = N_LAYERS, HIDDEN, INTERMEDIATE
    scale = jnp.float32(1.0 / (HEAD_DIM ** 0.5))     # 0.25: exact in bf16

    # bf16 matmul-weight slab: per-layer [wqkv | wo | wi], final slot [pool_w | cls_w]
    wslab = jnp.zeros((L + 1, H, WSLAB_COLS), bf16)
    for l in range(L):
        wqkv_l = p["wqkv"][l]
        q_scaled = (wqkv_l[:, :H].astype(f32) * scale).astype(bf16)   # fold 1/sqrt(d)
        wqkv_l = wqkv_l.at[:, :H].set(q_scaled)
        wslab = wslab.at[l, :, 0:3 * H].set(wqkv_l)
        wslab = wslab.at[l, :, 3 * H:4 * H].set(p["wo"][l])
        wslab = wslab.at[l, :, 4 * H:4 * H + I].set(p["wi"][l])
    wslab = wslab.at[L, :, 0:H].set(p["pool_w"])
    wslab = wslab.at[L, :, H:H + NUM_LABELS].set(p["cls_w"])

    # f32 bias / LayerNorm vector slab, one padded 128-lane row per vector
    vecs = jnp.zeros((VEC_ROWS, 128), f32)

    def put(v, row, x):
        x = jnp.reshape(x.astype(f32), (-1,))
        return v.at[row, :x.shape[0]].set(x)

    vecs = put(vecs, ROW_EMB_G, p["emb_ln_g"])
    vecs = put(vecs, ROW_EMB_B, p["emb_ln_b"])
    for l in range(L):
        bqkv_l = p["bqkv"][l].reshape(-1)
        bqkv_l = bqkv_l.at[:H].set(bqkv_l[:H] * scale)               # fold 1/sqrt(d)
        vecs = put(vecs, _lrow(l, 0), bqkv_l)
        vecs = put(vecs, _lrow(l, 1), p["bo"][l])
        vecs = put(vecs, _lrow(l, 2), p["ln1_g"][l])
        vecs = put(vecs, _lrow(l, 3), p["ln1_b"][l])
        vecs = put(vecs, _lrow(l, 4), p["bi"][l])
        vecs = put(vecs, _lrow(l, 5), p["bf"][l])
        vecs = put(vecs, _lrow(l, 6), p["ln2_g"][l])
        vecs = put(vecs, _lrow(l, 7), p["ln2_b"][l])
    vecs = put(vecs, ROW_POOL_B, p["pool_b"])
    cls_b_row = jnp.full((128,), -1e30, f32).at[:NUM_LABELS].set(p["cls_b"].reshape(-1))
    vecs = vecs.at[ROW_CLS_B, :].set(cls_b_row)

    return {
        "word_emb": p["word_emb"],
        "pos_type": p["pos_emb"] + p["type_emb"][0:1],     # (MAX_POS, H) f32
        "wslab": wslab,
        "wf": p["wf"],
        "vecs": vecs,
    }


# ======================= pure-JAX reference (for checking) ====================

def reference_forward(params, x2, x3):
    f32, bf16 = jnp.float32, jnp.bfloat16
    HI = jax.lax.Precision.HIGHEST

    def mm(a, w):   # mirror the kernel: bf16 operands, f32 accumulation
        return jnp.dot(a.astype(bf16), w, preferred_element_type=f32)

    ids = x2.astype(jnp.int32)
    B, S = ids.shape
    mask = x3.astype(f32)
    emb = (params["word_emb"][ids].astype(f32)
           + params["pos_emb"][:S][None]
           + params["type_emb"][0][None, None])
    h = _layer_norm(emb, params["emb_ln_g"], params["emb_ln_b"])     # (B,S,H)
    bias = ((1.0 - mask) * -10000.0)[:, None, None, :]               # (B,1,1,S)
    scale = 1.0 / (HEAD_DIM ** 0.5)
    for l in range(N_LAYERS):
        qkv = mm(h, params["wqkv"][l]) + params["bqkv"][l]
        q, k, v = jnp.split(qkv, 3, axis=-1)
        sh = lambda t: t.reshape(B, S, N_HEADS, HEAD_DIM).transpose(0, 2, 1, 3)
        q, k, v = sh(q), sh(k), sh(v)
        s = jnp.einsum("bhqd,bhkd->bhqk", q, k, precision=HI) * scale + bias
        p = jax.nn.softmax(s, axis=-1)
        ctx = jnp.einsum("bhqk,bhkd->bhqd", p, v, precision=HI)
        ctx = ctx.transpose(0, 2, 1, 3).reshape(B, S, HIDDEN)
        attn = mm(ctx, params["wo"][l]) + params["bo"][l]
        h1 = _layer_norm(attn + h, params["ln1_g"][l], params["ln1_b"][l])
        inter = _gelu_tanh(mm(h1, params["wi"][l]) + params["bi"][l])
        ffn = mm(inter, params["wf"][l]) + params["bf"][l]
        h = _layer_norm(ffn + h1, params["ln2_g"][l], params["ln2_b"][l])
    pooled = jnp.tanh(mm(h[:, 0, :], params["pool_w"]) + params["pool_b"])
    logits = mm(pooled, params["cls_w"]) + params["cls_b"]
    return jax.nn.log_softmax(logits, axis=1)


# =================================== main =====================================

if __name__ == "__main__":
    key = jax.random.PRNGKey(0)
    k_param, k_ids = jax.random.split(key)
    params = init_params(k_param)
    packed = pack_params(params)          # one-time slab packing (layout only)

    B, S = 2, 8
    x2 = jax.random.randint(k_ids, (B, S), 0, VOCAB, dtype=jnp.int32)   # token ids
    x3 = jnp.ones((B, S), jnp.float32)                                  # attention mask

    out = jax.jit(my_model_forward)(packed, x2, x3)
    out = jax.block_until_ready(out)
    assert out.shape == (B, NUM_LABELS)
    # log-softmax rows should sum to ~1 after exp
    assert bool(jnp.allclose(jnp.exp(out).sum(axis=1), 1.0, atol=1e-3))
    # match pure-JAX reference (exact softmax division -> tighter tolerance)
    ref = reference_forward(params, x2, x3)
    assert bool(jnp.allclose(out, ref, atol=5e-3)), float(jnp.max(jnp.abs(out - ref)))
    print("KERNEL_OK")
</pallas_src>

<mosaic_0001>
module attributes {stable_mosaic.version = 11 : i64} {
  func.func @_fused_bert_kernel(%arg0: i32, %arg1: memref<16x1xi32, #tpu.memory_space<vmem>>, %arg2: memref<2x8xf32, #tpu.memory_space<vmem>>, %arg3: memref<128x32xbf16, #tpu.memory_space<vmem>>, %arg4: memref<8x32xf32, #tpu.memory_space<vmem>>, %arg5: memref<3x32x256xbf16, #tpu.memory_space<vmem>>, %arg6: memref<2x128x32xbf16, #tpu.memory_space<vmem>>, %arg7: memref<20x128xf32, #tpu.memory_space<vmem>>, %arg8: memref<2x128xf32, #tpu.memory_space<vmem>>, %arg9: memref<16x32xf32, #tpu.memory_space<vmem>>) attributes {dimension_semantics = [#tpu.dimension_semantics<arbitrary>], iteration_bounds = array<i64: 1>, scalar_prefetch = 0 : i64, scratch_operands = 1 : i64, tpu.core_type = #tpu.core_type<tc>, window_params = [{pipeline_mode = #tpu.pipeline_mode<synchronous>, transform_indices = @transform_0, window_bounds = array<i64: 16, 1>}, {pipeline_mode = #tpu.pipeline_mode<synchronous>, transform_indices = @transform_1, window_bounds = array<i64: 2, 8>}, {pipeline_mode = #tpu.pipeline_mode<synchronous>, transform_indices = @transform_2, window_bounds = array<i64: 128, 32>}, {pipeline_mode = #tpu.pipeline_mode<synchronous>, transform_indices = @transform_3, window_bounds = array<i64: 8, 32>}, {pipeline_mode = #tpu.pipeline_mode<synchronous>, transform_indices = @transform_4, window_bounds = array<i64: 3, 32, 256>}, {pipeline_mode = #tpu.pipeline_mode<synchronous>, transform_indices = @transform_5, window_bounds = array<i64: 2, 128, 32>}, {pipeline_mode = #tpu.pipeline_mode<synchronous>, transform_indices = @transform_6, window_bounds = array<i64: 20, 128>}, {pipeline_mode = #tpu.pipeline_mode<synchronous>, transform_indices = @transform_7, window_bounds = array<i64: 2, 128>}]} {
    %c0 = arith.constant 0 : index
    %c0_0 = arith.constant 0 : index
    %0 = vector.load %arg1[%c0, %c0_0] : memref<16x1xi32, #tpu.memory_space<vmem>>, vector<16x1xi32>
    %1 = tpu.iota {dimensions = array<i32: 1>} : vector<16x128xi32>
    %2 = vector.broadcast %0 : vector<16x1xi32> to vector<16x128xi32>
    %3 = arith.cmpi eq, %1, %2 : vector<16x128xi32>
    %4 = arith.extui %3 : vector<16x128xi1> to vector<16x128xi32>
    %5 = arith.sitofp %4 : vector<16x128xi32> to vector<16x128xf32>
    %6 = arith.truncf %5 : vector<16x128xf32> to vector<16x128xbf16>
    %c0_1 = arith.constant 0 : index
    %c0_2 = arith.constant 0 : index
    %7 = vector.load %arg3[%c0_1, %c0_2] : memref<128x32xbf16, #tpu.memory_space<vmem>>, vector<128x32xbf16>
    %cst = arith.constant dense<0.000000e+00> : vector<16x32xf32>
    %8 = tpu.matmul %6, %7, %cst {dimension_numbers = #tpu.dot_dimension_numbers<[1], [0], [0], [1], [0, 0, 1, 1], [], []>} : vector<16x128xbf16>, vector<128x32xbf16>, vector<16x32xf32> -> vector<16x32xf32>
    %9 = vector.shape_cast %8 : vector<16x32xf32> to vector<2x8x32xf32>
    %c0_3 = arith.constant 0 : index
    %c0_4 = arith.constant 0 : index
    %10 = vector.load %arg4[%c0_3, %c0_4] : memref<8x32xf32, #tpu.memory_space<vmem>>, vector<8x32xf32>
    %11 = vector.shape_cast %10 : vector<8x32xf32> to vector<1x8x32xf32>
    %12 = vector.broadcast %11 : vector<1x8x32xf32> to vector<2x8x32xf32>
    %13 = arith.addf %9, %12 : vector<2x8x32xf32>
    %14 = vector.shape_cast %13 : vector<2x8x32xf32> to vector<16x32xf32>
    %c0_5 = arith.constant 0 : index
    %c0_6 = arith.constant 0 : index
    %15 = vector.load %arg7[%c0_5, %c0_6] : memref<20x128xf32, #tpu.memory_space<vmem>>, vector<1x32xf32>
    %c1 = arith.constant 1 : index
    %c0_7 = arith.constant 0 : index
    %16 = vector.load %arg7[%c1, %c0_7] : memref<20x128xf32, #tpu.memory_space<vmem>>, vector<1x32xf32>
    %cst_8 = arith.constant dense<0.000000e+00> : vector<16xf32>
    %17 = vector.multi_reduction <add>, %14, %cst_8 [1] : vector<16x32xf32> to vector<16xf32>
    %18 = vector.shape_cast %17 : vector<16xf32> to vector<16x1xf32>
    %cst_9 = arith.constant 3.200000e+01 : f32
    %19 = vector.broadcast %cst_9 : f32 to vector<16x1xf32>
    %20 = arith.divf %18, %19 : vector<16x1xf32>
    %21 = vector.broadcast %20 : vector<16x1xf32> to vector<16x32xf32>
    %22 = arith.subf %14, %21 : vector<16x32xf32>
    %23 = arith.mulf %22, %22 : vector<16x32xf32>
    %cst_10 = arith.constant dense<0.000000e+00> : vector<16xf32>
    %24 = vector.multi_reduction <add>, %23, %cst_10 [1] : vector<16x32xf32> to vector<16xf32>
    %25 = vector.shape_cast %24 : vector<16xf32> to vector<16x1xf32>
    %cst_11 = arith.constant 3.200000e+01 : f32
    %26 = vector.broadcast %cst_11 : f32 to vector<16x1xf32>
    %27 = arith.divf %25, %26 : vector<16x1xf32>
    %28 = vector.broadcast %20 : vector<16x1xf32> to vector<16x32xf32>
    %29 = arith.subf %14, %28 : vector<16x32xf32>
    %cst_12 = arith.constant 9.99999996E-13 : f32
    %30 = vector.broadcast %cst_12 : f32 to vector<16x1xf32>
    %31 = arith.addf %27, %30 : vector<16x1xf32>
    %32 = math.rsqrt %31 : vector<16x1xf32>
    %33 = vector.broadcast %32 : vector<16x1xf32> to vector<16x32xf32>
    %34 = arith.mulf %29, %33 : vector<16x32xf32>
    %35 = vector.broadcast %15 : vector<1x32xf32> to vector<16x32xf32>
    %36 = arith.mulf %34, %35 : vector<16x32xf32>
    %37 = vector.broadcast %16 : vector<1x32xf32> to vector<16x32xf32>
    %38 = arith.addf %36, %37 : vector<16x32xf32>
    %c0_13 = arith.constant 0 : index
    %c0_14 = arith.constant 0 : index
    %39 = vector.load %arg2[%c0_13, %c0_14] : memref<2x8xf32, #tpu.memory_space<vmem>>, vector<2x8xf32>
    %cst_15 = arith.constant 1.000000e+00 : f32
    %40 = vector.broadcast %cst_15 : f32 to vector<2x8xf32>
    %41 = arith.subf %40, %39 : vector<2x8xf32>
    %cst_16 = arith.constant -1.000000e+04 : f32
    %42 = vector.broadcast %cst_16 : f32 to vector<2x8xf32>
    %43 = arith.mulf %41, %42 : vector<2x8xf32>
    %c0_17 = arith.constant 0 : index
    %c0_18 = arith.constant 0 : index
    %c0_19 = arith.constant 0 : index
    %44 = vector.load %arg5[%c0_17, %c0_18, %c0_19] : memref<3x32x256xbf16, #tpu.memory_space<vmem>>, vector<1x32x256xbf16>
    %45 = vector.shape_cast %44 : vector<1x32x256xbf16> to vector<32x256xbf16>
    %46 = vector.extract_strided_slice %45 {offsets = [0, 0], sizes = [32, 96], strides = [1, 1]} : vector<32x256xbf16> to vector<32x96xbf16>
    %47 = vector.extract_strided_slice %45 {offsets = [0, 96], sizes = [32, 32], strides = [1, 1]} : vector<32x256xbf16> to vector<32x32xbf16>
    %48 = vector.extract_strided_slice %45 {offsets = [0, 128], sizes = [32, 128], strides = [1, 1]} : vector<32x256xbf16> to vector<32x128xbf16>
    %49 = arith.truncf %38 : vector<16x32xf32> to vector<16x32xbf16>
    %cst_20 = arith.constant dense<0.000000e+00> : vector<16x96xf32>
    %50 = tpu.matmul %49, %46, %cst_20 {dimension_numbers = #tpu.dot_dimension_numbers<[1], [0], [0], [1], [0, 0, 1, 1], [], []>} : vector<16x32xbf16>, vector<32x96xbf16>, vector<16x96xf32> -> vector<16x96xf32>
    %c2 = arith.constant 2 : index
    %c0_21 = arith.constant 0 : index
    %51 = vector.load %arg7[%c2, %c0_21] : memref<20x128xf32, #tpu.memory_space<vmem>>, vector<1x96xf32>
    %52 = vector.broadcast %51 : vector<1x96xf32> to vector<16x96xf32>
    %53 = arith.addf %50, %52 : vector<16x96xf32>
    %54 = vector.extract_strided_slice %53 {offsets = [0, 0], sizes = [16, 32], strides = [1, 1]} : vector<16x96xf32> to vector<16x32xf32>
    %55 = vector.extract_strided_slice %53 {offsets = [0, 32], sizes = [16, 32], strides = [1, 1]} : vector<16x96xf32> to vector<16x32xf32>
    %56 = vector.extract_strided_slice %53 {offsets = [0, 64], sizes = [16, 32], strides = [1, 1]} : vector<16x96xf32> to vector<16x32xf32>
    %57 = vector.extract_strided_slice %43 {offsets = [0, 0], sizes = [1, 8], strides = [1, 1]} : vector<2x8xf32> to vector<1x8xf32>
    %58 = vector.extract_strided_slice %54 {offsets = [0, 0], sizes = [8, 16], strides = [1, 1]} : vector<16x32xf32> to vector<8x16xf32>
    %59 = vector.extract_strided_slice %55 {offsets = [0, 0], sizes = [8, 16], strides = [1, 1]} : vector<16x32xf32> to vector<8x16xf32>
    %60 = vector.extract_strided_slice %56 {offsets = [0, 0], sizes = [8, 16], strides = [1, 1]} : vector<16x32xf32> to vector<8x16xf32>
    %61 = tpu.transpose %59, [1, 0] : vector<8x16xf32> -> vector<16x8xf32>
    %cst_22 = arith.constant dense<0.000000e+00> : vector<8x8xf32>
    %62 = tpu.matmul %58, %61, %cst_22 {dimension_numbers = #tpu.dot_dimension_numbers<[1], [0], [0], [1], [0, 0, 1, 1], [], []>} : vector<8x16xf32>, vector<16x8xf32>, vector<8x8xf32> -> vector<8x8xf32>
    %63 = vector.broadcast %57 : vector<1x8xf32> to vector<8x8xf32>
    %64 = arith.addf %62, %63 : vector<8x8xf32>
    %cst_23 = arith.constant dense<0xFF800000> : vector<8xf32>
    %65 = vector.multi_reduction <maximumf>, %64, %cst_23 [1] : vector<8x8xf32> to vector<8xf32>
    %66 = vector.shape_cast %65 : vector<8xf32> to vector<8x1xf32>
    %67 = vector.broadcast %66 : vector<8x1xf32> to vector<8x8xf32>
    %68 = arith.subf %64, %67 : vector<8x8xf32>
    %69 = math.exp %68 : vector<8x8xf32>
    %cst_24 = arith.constant dense<0.000000e+00> : vector<8xf32>
    %70 = vector.multi_reduction <add>, %69, %cst_24 [1] : vector<8x8xf32> to vector<8xf32>
    %71 = vector.shape_cast %70 : vector<8xf32> to vector<8x1xf32>
    %72 = vector.broadcast %71 : vector<8x1xf32> to vector<8x8xf32>
    %73 = arith.divf %69, %72 : vector<8x8xf32>
    %cst_25 = arith.constant dense<0.000000e+00> : vector<8x16xf32>
    %74 = tpu.matmul %73, %60, %cst_25 {dimension_numbers = #tpu.dot_dimension_numbers<[1], [0], [0], [1], [0, 0, 1, 1], [], []>} : vector<8x8xf32>, vector<8x16xf32>, vector<8x16xf32> -> vector<8x16xf32>
    %c0_26 = arith.constant 0 : index
    %c0_27 = arith.constant 0 : index
    %75 = vector.load %arg9[%c0_26, %c0_27] : memref<16x32xf32, #tpu.memory_space<vmem>>, vector<8x16xf32>
    tpu.vector_store %arg9[%c0_26, %c0_27], %74 {strides = array<i32>} : memref<16x32xf32, #tpu.memory_space<vmem>>, vector<8x16xf32>,
    %76 = vector.extract_strided_slice %54 {offsets = [0, 16], sizes = [8, 16], strides = [1, 1]} : vector<16x32xf32> to vector<8x16xf32>
    %77 = vector.extract_strided_slice %55 {offsets = [0, 16], sizes = [8, 16], strides = [1, 1]} : vector<16x32xf32> to vector<8x16xf32>
    %78 = vector.extract_strided_slice %56 {offsets = [0, 16], sizes = [8, 16], strides = [1, 1]} : vector<16x32xf32> to vector<8x16xf32>
    %79 = tpu.transpose %77, [1, 0] : vector<8x16xf32> -> vector<16x8xf32>
    %cst_28 = arith.constant dense<0.000000e+00> : vector<8x8xf32>
    %80 = tpu.matmul %76, %79, %cst_28 {dimension_numbers = #tpu.dot_dimension_numbers<[1], [0], [0], [1], [0, 0, 1, 1], [], []>} : vector<8x16xf32>, vector<16x8xf32>, vector<8x8xf32> -> vector<8x8xf32>
    %81 = vector.broadcast %57 : vector<1x8xf32> to vector<8x8xf32>
    %82 = arith.addf %80, %81 : vector<8x8xf32>
    %cst_29 = arith.constant dense<0xFF800000> : vector<8xf32>
    %83 = vector.multi_reduction <maximumf>, %82, %cst_29 [1] : vector<8x8xf32> to vector<8xf32>
    %84 = vector.shape_cast %83 : vector<8xf32> to vector<8x1xf32>
    %85 = vector.broadcast %84 : vector<8x1xf32> to vector<8x8xf32>
    %86 = arith.subf %82, %85 : vector<8x8xf32>
    %87 = math.exp %86 : vector<8x8xf32>
    %cst_30 = arith.constant dense<0.000000e+00> : vector<8xf32>
    %88 = vector.multi_reduction <add>, %87, %cst_30 [1] : vector<8x8xf32> to vector<8xf32>
    %89 = vector.shape_cast %88 : vector<8xf32> to vector<8x1xf32>
    %90 = vector.broadcast %89 : vector<8x1xf32> to vector<8x8xf32>
    %91 = arith.divf %87, %90 : vector<8x8xf32>
    %cst_31 = arith.constant dense<0.000000e+00> : vector<8x16xf32>
    %92 = tpu.matmul %91, %78, %cst_31 {dimension_numbers = #tpu.dot_dimension_numbers<[1], [0], [0], [1], [0, 0, 1, 1], [], []>} : vector<8x8xf32>, vector<8x16xf32>, vector<8x16xf32> -> vector<8x16xf32>
    %c0_32 = arith.constant 0 : index
    %c16 = arith.constant 16 : index
    %93 = vector.load %arg9[%c0_32, %c16] : memref<16x32xf32, #tpu.memory_space<vmem>>, vector<8x16xf32>
    tpu.vector_store %arg9[%c0_32, %c16], %92 {strides = array<i32>} : memref<16x32xf32, #tpu.memory_space<vmem>>, vector<8x16xf32>,
    %94 = vector.extract_strided_slice %43 {offsets = [1, 0], sizes = [1, 8], strides = [1, 1]} : vector<2x8xf32> to vector<1x8xf32>
    %95 = vector.extract_strided_slice %54 {offsets = [8, 0], sizes = [8, 16], strides = [1, 1]} : vector<16x32xf32> to vector<8x16xf32>
    %96 = vector.extract_strided_slice %55 {offsets = [8, 0], sizes = [8, 16], strides = [1, 1]} : vector<16x32xf32> to vector<8x16xf32>
    %97 = vector.extract_strided_slice %56 {offsets = [8, 0], sizes = [8, 16], strides = [1, 1]} : vector<16x32xf32> to vector<8x16xf32>
    %98 = tpu.transpose %96, [1, 0] : vector<8x16xf32> -> vector<16x8xf32>
    %cst_33 = arith.constant dense<0.000000e+00> : vector<8x8xf32>
    %99 = tpu.matmul %95, %98, %cst_33 {dimension_numbers = #tpu.dot_dimension_numbers<[1], [0], [0], [1], [0, 0, 1, 1], [], []>} : vector<8x16xf32>, vector<16x8xf32>, vector<8x8xf32> -> vector<8x8xf32>
    %100 = vector.broadcast %94 : vector<1x8xf32> to vector<8x8xf32>
    %101 = arith.addf %99, %100 : vector<8x8xf32>
    %cst_34 = arith.constant dense<0xFF800000> : vector<8xf32>
    %102 = vector.multi_reduction <maximumf>, %101, %cst_34 [1] : vector<8x8xf32> to vector<8xf32>
    %103 = vector.shape_cast %102 : vector<8xf32> to vector<8x1xf32>
    %104 = vector.broadcast %103 : vector<8x1xf32> to vector<8x8xf32>
    %105 = arith.subf %101, %104 : vector<8x8xf32>
    %106 = math.exp %105 : vector<8x8xf32>
    %cst_35 = arith.constant dense<0.000000e+00> : vector<8xf32>
    %107 = vector.multi_reduction <add>, %106, %cst_35 [1] : vector<8x8xf32> to vector<8xf32>
    %108 = vector.shape_cast %107 : vector<8xf32> to vector<8x1xf32>
    %109 = vector.broadcast %108 : vector<8x1xf32> to vector<8x8xf32>
    %110 = arith.divf %106, %109 : vector<8x8xf32>
    %cst_36 = arith.constant dense<0.000000e+00> : vector<8x16xf32>
    %111 = tpu.matmul %110, %97, %cst_36 {dimension_numbers = #tpu.dot_dimension_numbers<[1], [0], [0], [1], [0, 0, 1, 1], [], []>} : vector<8x8xf32>, vector<8x16xf32>, vector<8x16xf32> -> vector<8x16xf32>
    %c8 = arith.constant 8 : index
    %c0_37 = arith.constant 0 : index
    %112 = vector.load %arg9[%c8, %c0_37] : memref<16x32xf32, #tpu.memory_space<vmem>>, vector<8x16xf32>
    tpu.vector_store %arg9[%c8, %c0_37], %111 {strides = array<i32>} : memref<16x32xf32, #tpu.memory_space<vmem>>, vector<8x16xf32>,
    %113 = vector.extract_strided_slice %54 {offsets = [8, 16], sizes = [8, 16], strides = [1, 1]} : vector<16x32xf32> to vector<8x16xf32>
    %114 = vector.extract_strided_slice %55 {offsets = [8, 16], sizes = [8, 16], strides = [1, 1]} : vector<16x32xf32> to vector<8x16xf32>
    %115 = vector.extract_strided_slice %56 {offsets = [8, 16], sizes = [8, 16], strides = [1, 1]} : vector<16x32xf32> to vector<8x16xf32>
    %116 = tpu.transpose %114, [1, 0] : vector<8x16xf32> -> vector<16x8xf32>
    %cst_38 = arith.constant dense<0.000000e+00> : vector<8x8xf32>
    %117 = tpu.matmul %113, %116, %cst_38 {dimension_numbers = #tpu.dot_dimension_numbers<[1], [0], [0], [1], [0, 0, 1, 1], [], []>} : vector<8x16xf32>, vector<16x8xf32>, vector<8x8xf32> -> vector<8x8xf32>
    %118 = vector.broadcast %94 : vector<1x8xf32> to vector<8x8xf32>
    %119 = arith.addf %117, %118 : vector<8x8xf32>
    %cst_39 = arith.constant dense<0xFF800000> : vector<8xf32>
    %120 = vector.multi_reduction <maximumf>, %119, %cst_39 [1] : vector<8x8xf32> to vector<8xf32>
    %121 = vector.shape_cast %120 : vector<8xf32> to vector<8x1xf32>
    %122 = vector.broadcast %121 : vector<8x1xf32> to vector<8x8xf32>
    %123 = arith.subf %119, %122 : vector<8x8xf32>
    %124 = math.exp %123 : vector<8x8xf32>
    %cst_40 = arith.constant dense<0.000000e+00> : vector<8xf32>
    %125 = vector.multi_reduction <add>, %124, %cst_40 [1] : vector<8x8xf32> to vector<8xf32>
    %126 = vector.shape_cast %125 : vector<8xf32> to vector<8x1xf32>
    %127 = vector.broadcast %126 : vector<8x1xf32> to vector<8x8xf32>
    %128 = arith.divf %124, %127 : vector<8x8xf32>
    %cst_41 = arith.constant dense<0.000000e+00> : vector<8x16xf32>
    %129 = tpu.matmul %128, %115, %cst_41 {dimension_numbers = #tpu.dot_dimension_numbers<[1], [0], [0], [1], [0, 0, 1, 1], [], []>} : vector<8x8xf32>, vector<8x16xf32>, vector<8x16xf32> -> vector<8x16xf32>
    %c8_42 = arith.constant 8 : index
    %c16_43 = arith.constant 16 : index
    %130 = vector.load %arg9[%c8_42, %c16_43] : memref<16x32xf32, #tpu.memory_space<vmem>>, vector<8x16xf32>
    tpu.vector_store %arg9[%c8_42, %c16_43], %129 {strides = array<i32>} : memref<16x32xf32, #tpu.memory_space<vmem>>, vector<8x16xf32>,
    %c0_44 = arith.constant 0 : index
    %c0_45 = arith.constant 0 : index
    %131 = vector.load %arg9[%c0_44, %c0_45] : memref<16x32xf32, #tpu.memory_space<vmem>>, vector<16x32xf32>
    %132 = arith.truncf %131 : vector<16x32xf32> to vector<16x32xbf16>
    %cst_46 = arith.constant dense<0.000000e+00> : vector<16x32xf32>
    %133 = tpu.matmul %132, %47, %cst_46 {dimension_numbers = #tpu.dot_dimension_numbers<[1], [0], [0], [1], [0, 0, 1, 1], [], []>} : vector<16x32xbf16>, vector<32x32xbf16>, vector<16x32xf32> -> vector<16x32xf32>
    %c3 = arith.constant 3 : index
    %c0_47 = arith.constant 0 : index
    %134 = vector.load %arg7[%c3, %c0_47] : memref<20x128xf32, #tpu.memory_space<vmem>>, vector<1x32xf32>
    %135 = vector.broadcast %134 : vector<1x32xf32> to vector<16x32xf32>
    %136 = arith.addf %133, %135 : vector<16x32xf32>
    %137 = arith.addf %136, %38 : vector<16x32xf32>
    %c4 = arith.constant 4 : index
    %c0_48 = arith.constant 0 : index
    %138 = vector.load %arg7[%c4, %c0_48] : memref<20x128xf32, #tpu.memory_space<vmem>>, vector<1x32xf32>
    %c5 = arith.constant 5 : index
    %c0_49 = arith.constant 0 : index
    %139 = vector.load %arg7[%c5, %c0_49] : memref<20x128xf32, #tpu.memory_space<vmem>>, vector<1x32xf32>
    %cst_50 = arith.constant dense<0.000000e+00> : vector<16xf32>
    %140 = vector.multi_reduction <add>, %137, %cst_50 [1] : vector<16x32xf32> to vector<16xf32>
    %141 = vector.shape_cast %140 : vector<16xf32> to vector<16x1xf32>
    %cst_51 = arith.constant 3.200000e+01 : f32
    %142 = vector.broadcast %cst_51 : f32 to vector<16x1xf32>
    %143 = arith.divf %141, %142 : vector<16x1xf32>
    %144 = vector.broadcast %143 : vector<16x1xf32> to vector<16x32xf32>
    %145 = arith.subf %137, %144 : vector<16x32xf32>
    %146 = arith.mulf %145, %145 : vector<16x32xf32>
    %cst_52 = arith.constant dense<0.000000e+00> : vector<16xf32>
    %147 = vector.multi_reduction <add>, %146, %cst_52 [1] : vector<16x32xf32> to vector<16xf32>
    %148 = vector.shape_cast %147 : vector<16xf32> to vector<16x1xf32>
    %cst_53 = arith.constant 3.200000e+01 : f32
    %149 = vector.broadcast %cst_53 : f32 to vector<16x1xf32>
    %150 = arith.divf %148, %149 : vector<16x1xf32>
    %151 = vector.broadcast %143 : vector<16x1xf32> to vector<16x32xf32>
    %152 = arith.subf %137, %151 : vector<16x32xf32>
    %cst_54 = arith.constant 9.99999996E-13 : f32
    %153 = vector.broadcast %cst_54 : f32 to vector<16x1xf32>
    %154 = arith.addf %150, %153 : vector<16x1xf32>
    %155 = math.rsqrt %154 : vector<16x1xf32>
    %156 = vector.broadcast %155 : vector<16x1xf32> to vector<16x32xf32>
    %157 = arith.mulf %152, %156 : vector<16x32xf32>
    %158 = vector.broadcast %138 : vector<1x32xf32> to vector<16x32xf32>
    %159 = arith.mulf %157, %158 : vector<16x32xf32>
    %160 = vector.broadcast %139 : vector<1x32xf32> to vector<16x32xf32>
    %161 = arith.addf %159, %160 : vector<16x32xf32>
    %162 = arith.truncf %161 : vector<16x32xf32> to vector<16x32xbf16>
    %cst_55 = arith.constant dense<0.000000e+00> : vector<16x128xf32>
    %163 = tpu.matmul %162, %48, %cst_55 {dimension_numbers = #tpu.dot_dimension_numbers<[1], [0], [0], [1], [0, 0, 1, 1], [], []>} : vector<16x32xbf16>, vector<32x128xbf16>, vector<16x128xf32> -> vector<16x128xf32>
    %c6 = arith.constant 6 : index
    %c0_56 = arith.constant 0 : index
    %164 = vector.load %arg7[%c6, %c0_56] : memref<20x128xf32, #tpu.memory_space<vmem>>, vector<1x128xf32>
    %165 = vector.broadcast %164 : vector<1x128xf32> to vector<16x128xf32>
    %166 = arith.addf %163, %165 : vector<16x128xf32>
    %cst_57 = arith.constant 5.000000e-01 : f32
    %167 = vector.broadcast %cst_57 : f32 to vector<16x128xf32>
    %168 = arith.mulf %167, %166 : vector<16x128xf32>
    %cst_58 = arith.constant 4.471500e-02 : f32
    %169 = vector.broadcast %cst_58 : f32 to vector<16x128xf32>
    %170 = arith.mulf %169, %166 : vector<16x128xf32>
    %171 = arith.mulf %170, %166 : vector<16x128xf32>
    %172 = arith.mulf %171, %166 : vector<16x128xf32>
    %173 = arith.addf %166, %172 : vector<16x128xf32>
    %cst_59 = arith.constant 0.797884583 : f32
    %174 = vector.broadcast %cst_59 : f32 to vector<16x128xf32>
    %175 = arith.mulf %174, %173 : vector<16x128xf32>
    %176 = math.tanh %175 : vector<16x128xf32>
    %cst_60 = arith.constant 1.000000e+00 : f32
    %177 = vector.broadcast %cst_60 : f32 to vector<16x128xf32>
    %178 = arith.addf %177, %176 : vector<16x128xf32>
    %179 = arith.mulf %168, %178 : vector<16x128xf32>
    %180 = arith.truncf %179 : vector<16x128xf32> to vector<16x128xbf16>
    %c0_61 = arith.constant 0 : index
    %c0_62 = arith.constant 0 : index
    %c0_63 = arith.constant 0 : index
    %181 = vector.load %arg6[%c0_61, %c0_62, %c0_63] : memref<2x128x32xbf16, #tpu.memory_space<vmem>>, vector<1x128x32xbf16>
    %182 = vector.shape_cast %181 : vector<1x128x32xbf16> to vector<128x32xbf16>
    %cst_64 = arith.constant dense<0.000000e+00> : vector<16x32xf32>
    %183 = tpu.matmul %180, %182, %cst_64 {dimension_numbers = #tpu.dot_dimension_numbers<[1], [0], [0], [1], [0, 0, 1, 1], [], []>} : vector<16x128xbf16>, vector<128x32xbf16>, vector<16x32xf32> -> vector<16x32xf32>
    %c7 = arith.constant 7 : index
    %c0_65 = arith.constant 0 : index
    %184 = vector.load %arg7[%c7, %c0_65] : memref<20x128xf32, #tpu.memory_space<vmem>>, vector<1x32xf32>
    %185 = vector.broadcast %184 : vector<1x32xf32> to vector<16x32xf32>
    %186 = arith.addf %183, %185 : vector<16x32xf32>
    %187 = arith.addf %186, %161 : vector<16x32xf32>
    %c8_66 = arith.constant 8 : index
    %c0_67 = arith.constant 0 : index
    %188 = vector.load %arg7[%c8_66, %c0_67] : memref<20x128xf32, #tpu.memory_space<vmem>>, vector<1x32xf32>
    %c9 = arith.constant 9 : index
    %c0_68 = arith.constant 0 : index
    %189 = vector.load %arg7[%c9, %c0_68] : memref<20x128xf32, #tpu.memory_space<vmem>>, vector<1x32xf32>
    %cst_69 = arith.constant dense<0.000000e+00> : vector<16xf32>
    %190 = vector.multi_reduction <add>, %187, %cst_69 [1] : vector<16x32xf32> to vector<16xf32>
    %191 = vector.shape_cast %190 : vector<16xf32> to vector<16x1xf32>
    %cst_70 = arith.constant 3.200000e+01 : f32
    %192 = vector.broadcast %cst_70 : f32 to vector<16x1xf32>
    %193 = arith.divf %191, %192 : vector<16x1xf32>
    %194 = vector.broadcast %193 : vector<16x1xf32> to vector<16x32xf32>
    %195 = arith.subf %187, %194 : vector<16x32xf32>
    %196 = arith.mulf %195, %195 : vector<16x32xf32>
    %cst_71 = arith.constant dense<0.000000e+00> : vector<16xf32>
    %197 = vector.multi_reduction <add>, %196, %cst_71 [1] : vector<16x32xf32> to vector<16xf32>
    %198 = vector.shape_cast %197 : vector<16xf32> to vector<16x1xf32>
    %cst_72 = arith.constant 3.200000e+01 : f32
    %199 = vector.broadcast %cst_72 : f32 to vector<16x1xf32>
    %200 = arith.divf %198, %199 : vector<16x1xf32>
    %201 = vector.broadcast %193 : vector<16x1xf32> to vector<16x32xf32>
    %202 = arith.subf %187, %201 : vector<16x32xf32>
    %cst_73 = arith.constant 9.99999996E-13 : f32
    %203 = vector.broadcast %cst_73 : f32 to vector<16x1xf32>
    %204 = arith.addf %200, %203 : vector<16x1xf32>
    %205 = math.rsqrt %204 : vector<16x1xf32>
    %206 = vector.broadcast %205 : vector<16x1xf32> to vector<16x32xf32>
    %207 = arith.mulf %202, %206 : vector<16x32xf32>
    %208 = vector.broadcast %188 : vector<1x32xf32> to vector<16x32xf32>
    %209 = arith.mulf %207, %208 : vector<16x32xf32>
    %210 = vector.broadcast %189 : vector<1x32xf32> to vector<16x32xf32>
    %211 = arith.addf %209, %210 : vector<16x32xf32>
    %c1_74 = arith.constant 1 : index
    %c0_75 = arith.constant 0 : index
    %c0_76 = arith.constant 0 : index
    %212 = vector.load %arg5[%c1_74, %c0_75, %c0_76] : memref<3x32x256xbf16, #tpu.memory_space<vmem>>, vector<1x32x256xbf16>
    %213 = vector.shape_cast %212 : vector<1x32x256xbf16> to vector<32x256xbf16>
    %214 = vector.extract_strided_slice %213 {offsets = [0, 0], sizes = [32, 96], strides = [1, 1]} : vector<32x256xbf16> to vector<32x96xbf16>
    %215 = vector.extract_strided_slice %213 {offsets = [0, 96], sizes = [32, 32], strides = [1, 1]} : vector<32x256xbf16> to vector<32x32xbf16>
    %216 = vector.extract_strided_slice %213 {offsets = [0, 128], sizes = [32, 128], strides = [1, 1]} : vector<32x256xbf16> to vector<32x128xbf16>
    %217 = arith.truncf %211 : vector<16x32xf32> to vector<16x32xbf16>
    %cst_77 = arith.constant dense<0.000000e+00> : vector<16x96xf32>
    %218 = tpu.matmul %217, %214, %cst_77 {dimension_numbers = #tpu.dot_dimension_numbers<[1], [0], [0], [1], [0, 0, 1, 1], [], []>} : vector<16x32xbf16>, vector<32x96xbf16>, vector<16x96xf32> -> vector<16x96xf32>
    %c10 = arith.constant 10 : index
    %c0_78 = arith.constant 0 : index
    %219 = vector.load %arg7[%c10, %c0_78] : memref<20x128xf32, #tpu.memory_space<vmem>>, vector<1x96xf32>
    %220 = vector.broadcast %219 : vector<1x96xf32> to vector<16x96xf32>
    %221 = arith.addf %218, %220 : vector<16x96xf32>
    %222 = vector.extract_strided_slice %221 {offsets = [0, 0], sizes = [16, 32], strides = [1, 1]} : vector<16x96xf32> to vector<16x32xf32>
    %223 = vector.extract_strided_slice %221 {offsets = [0, 32], sizes = [16, 32], strides = [1, 1]} : vector<16x96xf32> to vector<16x32xf32>
    %224 = vector.extract_strided_slice %221 {offsets = [0, 64], sizes = [16, 32], strides = [1, 1]} : vector<16x96xf32> to vector<16x32xf32>
    %225 = vector.extract_strided_slice %43 {offsets = [0, 0], sizes = [1, 8], strides = [1, 1]} : vector<2x8xf32> to vector<1x8xf32>
    %226 = vector.extract_strided_slice %222 {offsets = [0, 0], sizes = [8, 16], strides = [1, 1]} : vector<16x32xf32> to vector<8x16xf32>
    %227 = vector.extract_strided_slice %223 {offsets = [0, 0], sizes = [8, 16], strides = [1, 1]} : vector<16x32xf32> to vector<8x16xf32>
    %228 = vector.extract_strided_slice %224 {offsets = [0, 0], sizes = [8, 16], strides = [1, 1]} : vector<16x32xf32> to vector<8x16xf32>
    %229 = tpu.transpose %227, [1, 0] : vector<8x16xf32> -> vector<16x8xf32>
    %cst_79 = arith.constant dense<0.000000e+00> : vector<8x8xf32>
    %230 = tpu.matmul %226, %229, %cst_79 {dimension_numbers = #tpu.dot_dimension_numbers<[1], [0], [0], [1], [0, 0, 1, 1], [], []>} : vector<8x16xf32>, vector<16x8xf32>, vector<8x8xf32> -> vector<8x8xf32>
    %231 = vector.broadcast %225 : vector<1x8xf32> to vector<8x8xf32>
    %232 = arith.addf %230, %231 : vector<8x8xf32>
    %cst_80 = arith.constant dense<0xFF800000> : vector<8xf32>
    %233 = vector.multi_reduction <maximumf>, %232, %cst_80 [1] : vector<8x8xf32> to vector<8xf32>
    %234 = vector.shape_cast %233 : vector<8xf32> to vector<8x1xf32>
    %235 = vector.broadcast %234 : vector<8x1xf32> to vector<8x8xf32>
    %236 = arith.subf %232, %235 : vector<8x8xf32>
    %237 = math.exp %236 : vector<8x8xf32>
    %cst_81 = arith.constant dense<0.000000e+00> : vector<8xf32>
    %238 = vector.multi_reduction <add>, %237, %cst_81 [1] : vector<8x8xf32> to vector<8xf32>
    %239 = vector.shape_cast %238 : vector<8xf32> to vector<8x1xf32>
    %240 = vector.broadcast %239 : vector<8x1xf32> to vector<8x8xf32>
    %241 = arith.divf %237, %240 : vector<8x8xf32>
    %cst_82 = arith.constant dense<0.000000e+00> : vector<8x16xf32>
    %242 = tpu.matmul %241, %228, %cst_82 {dimension_numbers = #tpu.dot_dimension_numbers<[1], [0], [0], [1], [0, 0, 1, 1], [], []>} : vector<8x8xf32>, vector<8x16xf32>, vector<8x16xf32> -> vector<8x16xf32>
    %c0_83 = arith.constant 0 : index
    %c0_84 = arith.constant 0 : index
    %243 = vector.load %arg9[%c0_83, %c0_84] : memref<16x32xf32, #tpu.memory_space<vmem>>, vector<8x16xf32>
    tpu.vector_store %arg9[%c0_83, %c0_84], %242 {strides = array<i32>} : memref<16x32xf32, #tpu.memory_space<vmem>>, vector<8x16xf32>,
    %244 = vector.extract_strided_slice %222 {offsets = [0, 16], sizes = [8, 16], strides = [1, 1]} : vector<16x32xf32> to vector<8x16xf32>
    %245 = vector.extract_strided_slice %223 {offsets = [0, 16], sizes = [8, 16], strides = [1, 1]} : vector<16x32xf32> to vector<8x16xf32>
    %246 = vector.extract_strided_slice %224 {offsets = [0, 16], sizes = [8, 16], strides = [1, 1]} : vector<16x32xf32> to vector<8x16xf32>
    %247 = tpu.transpose %245, [1, 0] : vector<8x16xf32> -> vector<16x8xf32>
    %cst_85 = arith.constant dense<0.000000e+00> : vector<8x8xf32>
    %248 = tpu.matmul %244, %247, %cst_85 {dimension_numbers = #tpu.dot_dimension_numbers<[1], [0], [0], [1], [0, 0, 1, 1], [], []>} : vector<8x16xf32>, vector<16x8xf32>, vector<8x8xf32> -> vector<8x8xf32>
    %249 = vector.broadcast %225 : vector<1x8xf32> to vector<8x8xf32>
    %250 = arith.addf %248, %249 : vector<8x8xf32>
    %cst_86 = arith.constant dense<0xFF800000> : vector<8xf32>
    %251 = vector.multi_reduction <maximumf>, %250, %cst_86 [1] : vector<8x8xf32> to vector<8xf32>
    %252 = vector.shape_cast %251 : vector<8xf32> to vector<8x1xf32>
    %253 = vector.broadcast %252 : vector<8x1xf32> to vector<8x8xf32>
    %254 = arith.subf %250, %253 : vector<8x8xf32>
    %255 = math.exp %254 : vector<8x8xf32>
    %cst_87 = arith.constant dense<0.000000e+00> : vector<8xf32>
    %256 = vector.multi_reduction <add>, %255, %cst_87 [1] : vector<8x8xf32> to vector<8xf32>
    %257 = vector.shape_cast %256 : vector<8xf32> to vector<8x1xf32>
    %258 = vector.broadcast %257 : vector<8x1xf32> to vector<8x8xf32>
    %259 = arith.divf %255, %258 : vector<8x8xf32>
    %cst_88 = arith.constant dense<0.000000e+00> : vector<8x16xf32>
    %260 = tpu.matmul %259, %246, %cst_88 {dimension_numbers = #tpu.dot_dimension_numbers<[1], [0], [0], [1], [0, 0, 1, 1], [], []>} : vector<8x8xf32>, vector<8x16xf32>, vector<8x16xf32> -> vector<8x16xf32>
    %c0_89 = arith.constant 0 : index
    %c16_90 = arith.constant 16 : index
    %261 = vector.load %arg9[%c0_89, %c16_90] : memref<16x32xf32, #tpu.memory_space<vmem>>, vector<8x16xf32>
    tpu.vector_store %arg9[%c0_89, %c16_90], %260 {strides = array<i32>} : memref<16x32xf32, #tpu.memory_space<vmem>>, vector<8x16xf32>,
    %262 = vector.extract_strided_slice %43 {offsets = [1, 0], sizes = [1, 8], strides = [1, 1]} : vector<2x8xf32> to vector<1x8xf32>
    %263 = vector.extract_strided_slice %222 {offsets = [8, 0], sizes = [8, 16], strides = [1, 1]} : vector<16x32xf32> to vector<8x16xf32>
    %264 = vector.extract_strided_slice %223 {offsets = [8, 0], sizes = [8, 16], strides = [1, 1]} : vector<16x32xf32> to vector<8x16xf32>
    %265 = vector.extract_strided_slice %224 {offsets = [8, 0], sizes = [8, 16], strides = [1, 1]} : vector<16x32xf32> to vector<8x16xf32>
    %266 = tpu.transpose %264, [1, 0] : vector<8x16xf32> -> vector<16x8xf32>
    %cst_91 = arith.constant dense<0.000000e+00> : vector<8x8xf32>
    %267 = tpu.matmul %263, %266, %cst_91 {dimension_numbers = #tpu.dot_dimension_numbers<[1], [0], [0], [1], [0, 0, 1, 1], [], []>} : vector<8x16xf32>, vector<16x8xf32>, vector<8x8xf32> -> vector<8x8xf32>
    %268 = vector.broadcast %262 : vector<1x8xf32> to vector<8x8xf32>
    %269 = arith.addf %267, %268 : vector<8x8xf32>
    %cst_92 = arith.constant dense<0xFF800000> : vector<8xf32>
    %270 = vector.multi_reduction <maximumf>, %269, %cst_92 [1] : vector<8x8xf32> to vector<8xf32>
    %271 = vector.shape_cast %270 : vector<8xf32> to vector<8x1xf32>
    %272 = vector.broadcast %271 : vector<8x1xf32> to vector<8x8xf32>
    %273 = arith.subf %269, %272 : vector<8x8xf32>
    %274 = math.exp %273 : vector<8x8xf32>
    %cst_93 = arith.constant dense<0.000000e+00> : vector<8xf32>
    %275 = vector.multi_reduction <add>, %274, %cst_93 [1] : vector<8x8xf32> to vector<8xf32>
    %276 = vector.shape_cast %275 : vector<8xf32> to vector<8x1xf32>
    %277 = vector.broadcast %276 : vector<8x1xf32> to vector<8x8xf32>
    %278 = arith.divf %274, %277 : vector<8x8xf32>
    %cst_94 = arith.constant dense<0.000000e+00> : vector<8x16xf32>
    %279 = tpu.matmul %278, %265, %cst_94 {dimension_numbers = #tpu.dot_dimension_numbers<[1], [0], [0], [1], [0, 0, 1, 1], [], []>} : vector<8x8xf32>, vector<8x16xf32>, vector<8x16xf32> -> vector<8x16xf32>
    %c8_95 = arith.constant 8 : index
    %c0_96 = arith.constant 0 : index
    %280 = vector.load %arg9[%c8_95, %c0_96] : memref<16x32xf32, #tpu.memory_space<vmem>>, vector<8x16xf32>
    tpu.vector_store %arg9[%c8_95, %c0_96], %279 {strides = array<i32>} : memref<16x32xf32, #tpu.memory_space<vmem>>, vector<8x16xf32>,
    %281 = vector.extract_strided_slice %222 {offsets = [8, 16], sizes = [8, 16], strides = [1, 1]} : vector<16x32xf32> to vector<8x16xf32>
    %282 = vector.extract_strided_slice %223 {offsets = [8, 16], sizes = [8, 16], strides = [1, 1]} : vector<16x32xf32> to vector<8x16xf32>
    %283 = vector.extract_strided_slice %224 {offsets = [8, 16], sizes = [8, 16], strides = [1, 1]} : vector<16x32xf32> to vector<8x16xf32>
    %284 = tpu.transpose %282, [1, 0] : vector<8x16xf32> -> vector<16x8xf32>
    %cst_97 = arith.constant dense<0.000000e+00> : vector<8x8xf32>
    %285 = tpu.matmul %281, %284, %cst_97 {dimension_numbers = #tpu.dot_dimension_numbers<[1], [0], [0], [1], [0, 0, 1, 1], [], []>} : vector<8x16xf32>, vector<16x8xf32>, vector<8x8xf32> -> vector<8x8xf32>
    %286 = vector.broadcast %262 : vector<1x8xf32> to vector<8x8xf32>
    %287 = arith.addf %285, %286 : vector<8x8xf32>
    %cst_98 = arith.constant dense<0xFF800000> : vector<8xf32>
    %288 = vector.multi_reduction <maximumf>, %287, %cst_98 [1] : vector<8x8xf32> to vector<8xf32>
    %289 = vector.shape_cast %288 : vector<8xf32> to vector<8x1xf32>
    %290 = vector.broadcast %289 : vector<8x1xf32> to vector<8x8xf32>
    %291 = arith.subf %287, %290 : vector<8x8xf32>
    %292 = math.exp %291 : vector<8x8xf32>
    %cst_99 = arith.constant dense<0.000000e+00> : vector<8xf32>
    %293 = vector.multi_reduction <add>, %292, %cst_99 [1] : vector<8x8xf32> to vector<8xf32>
    %294 = vector.shape_cast %293 : vector<8xf32> to vector<8x1xf32>
    %295 = vector.broadcast %294 : vector<8x1xf32> to vector<8x8xf32>
    %296 = arith.divf %292, %295 : vector<8x8xf32>
    %cst_100 = arith.constant dense<0.000000e+00> : vector<8x16xf32>
    %297 = tpu.matmul %296, %283, %cst_100 {dimension_numbers = #tpu.dot_dimension_numbers<[1], [0], [0], [1], [0, 0, 1, 1], [], []>} : vector<8x8xf32>, vector<8x16xf32>, vector<8x16xf32> -> vector<8x16xf32>
    %c8_101 = arith.constant 8 : index
    %c16_102 = arith.constant 16 : index
    %298 = vector.load %arg9[%c8_101, %c16_102] : memref<16x32xf32, #tpu.memory_space<vmem>>, vector<8x16xf32>
    tpu.vector_store %arg9[%c8_101, %c16_102], %297 {strides = array<i32>} : memref<16x32xf32, #tpu.memory_space<vmem>>, vector<8x16xf32>,
    %c0_103 = arith.constant 0 : index
    %c0_104 = arith.constant 0 : index
    %299 = vector.load %arg9[%c0_103, %c0_104] : memref<16x32xf32, #tpu.memory_space<vmem>>, vector<16x32xf32>
    %300 = arith.truncf %299 : vector<16x32xf32> to vector<16x32xbf16>
    %cst_105 = arith.constant dense<0.000000e+00> : vector<16x32xf32>
    %301 = tpu.matmul %300, %215, %cst_105 {dimension_numbers = #tpu.dot_dimension_numbers<[1], [0], [0], [1], [0, 0, 1, 1], [], []>} : vector<16x32xbf16>, vector<32x32xbf16>, vector<16x32xf32> -> vector<16x32xf32>
    %c11 = arith.constant 11 : index
    %c0_106 = arith.constant 0 : index
    %302 = vector.load %arg7[%c11, %c0_106] : memref<20x128xf32, #tpu.memory_space<vmem>>, vector<1x32xf32>
    %303 = vector.broadcast %302 : vector<1x32xf32> to vector<16x32xf32>
    %304 = arith.addf %301, %303 : vector<16x32xf32>
    %305 = arith.addf %304, %211 : vector<16x32xf32>
    %c12 = arith.constant 12 : index
    %c0_107 = arith.constant 0 : index
    %306 = vector.load %arg7[%c12, %c0_107] : memref<20x128xf32, #tpu.memory_space<vmem>>, vector<1x32xf32>
    %c13 = arith.constant 13 : index
    %c0_108 = arith.constant 0 : index
    %307 = vector.load %arg7[%c13, %c0_108] : memref<20x128xf32, #tpu.memory_space<vmem>>, vector<1x32xf32>
    %cst_109 = arith.constant dense<0.000000e+00> : vector<16xf32>
    %308 = vector.multi_reduction <add>, %305, %cst_109 [1] : vector<16x32xf32> to vector<16xf32>
    %309 = vector.shape_cast %308 : vector<16xf32> to vector<16x1xf32>
    %cst_110 = arith.constant 3.200000e+01 : f32
    %310 = vector.broadcast %cst_110 : f32 to vector<16x1xf32>
    %311 = arith.divf %309, %310 : vector<16x1xf32>
    %312 = vector.broadcast %311 : vector<16x1xf32> to vector<16x32xf32>
    %313 = arith.subf %305, %312 : vector<16x32xf32>
    %314 = arith.mulf %313, %313 : vector<16x32xf32>
    %cst_111 = arith.constant dense<0.000000e+00> : vector<16xf32>
    %315 = vector.multi_reduction <add>, %314, %cst_111 [1] : vector<16x32xf32> to vector<16xf32>
    %316 = vector.shape_cast %315 : vector<16xf32> to vector<16x1xf32>
    %cst_112 = arith.constant 3.200000e+01 : f32
    %317 = vector.broadcast %cst_112 : f32 to vector<16x1xf32>
    %318 = arith.divf %316, %317 : vector<16x1xf32>
    %319 = vector.broadcast %311 : vector<16x1xf32> to vector<16x32xf32>
    %320 = arith.subf %305, %319 : vector<16x32xf32>
    %cst_113 = arith.constant 9.99999996E-13 : f32
    %321 = vector.broadcast %cst_113 : f32 to vector<16x1xf32>
    %322 = arith.addf %318, %321 : vector<16x1xf32>
    %323 = math.rsqrt %322 : vector<16x1xf32>
    %324 = vector.broadcast %323 : vector<16x1xf32> to vector<16x32xf32>
    %325 = arith.mulf %320, %324 : vector<16x32xf32>
    %326 = vector.broadcast %306 : vector<1x32xf32> to vector<16x32xf32>
    %327 = arith.mulf %325, %326 : vector<16x32xf32>
    %328 = vector.broadcast %307 : vector<1x32xf32> to vector<16x32xf32>
    %329 = arith.addf %327, %328 : vector<16x32xf32>
    %330 = arith.truncf %329 : vector<16x32xf32> to vector<16x32xbf16>
    %cst_114 = arith.constant dense<0.000000e+00> : vector<16x128xf32>
    %331 = tpu.matmul %330, %216, %cst_114 {dimension_numbers = #tpu.dot_dimension_numbers<[1], [0], [0], [1], [0, 0, 1, 1], [], []>} : vector<16x32xbf16>, vector<32x128xbf16>, vector<16x128xf32> -> vector<16x128xf32>
    %c14 = arith.constant 14 : index
    %c0_115 = arith.constant 0 : index
    %332 = vector.load %arg7[%c14, %c0_115] : memref<20x128xf32, #tpu.memory_space<vmem>>, vector<1x128xf32>
    %333 = vector.broadcast %332 : vector<1x128xf32> to vector<16x128xf32>
    %334 = arith.addf %331, %333 : vector<16x128xf32>
    %cst_116 = arith.constant 5.000000e-01 : f32
    %335 = vector.broadcast %cst_116 : f32 to vector<16x128xf32>
    %336 = arith.mulf %335, %334 : vector<16x128xf32>
    %cst_117 = arith.constant 4.471500e-02 : f32
    %337 = vector.broadcast %cst_117 : f32 to vector<16x128xf32>
    %338 = arith.mulf %337, %334 : vector<16x128xf32>
    %339 = arith.mulf %338, %334 : vector<16x128xf32>
    %340 = arith.mulf %339, %334 : vector<16x128xf32>
    %341 = arith.addf %334, %340 : vector<16x128xf32>
    %cst_118 = arith.constant 0.797884583 : f32
    %342 = vector.broadcast %cst_118 : f32 to vector<16x128xf32>
    %343 = arith.mulf %342, %341 : vector<16x128xf32>
    %344 = math.tanh %343 : vector<16x128xf32>
    %cst_119 = arith.constant 1.000000e+00 : f32
    %345 = vector.broadcast %cst_119 : f32 to vector<16x128xf32>
    %346 = arith.addf %345, %344 : vector<16x128xf32>
    %347 = arith.mulf %336, %346 : vector<16x128xf32>
    %348 = arith.truncf %347 : vector<16x128xf32> to vector<16x128xbf16>
    %c1_120 = arith.constant 1 : index
    %c0_121 = arith.constant 0 : index
    %c0_122 = arith.constant 0 : index
    %349 = vector.load %arg6[%c1_120, %c0_121, %c0_122] : memref<2x128x32xbf16, #tpu.memory_space<vmem>>, vector<1x128x32xbf16>
    %350 = vector.shape_cast %349 : vector<1x128x32xbf16> to vector<128x32xbf16>
    %cst_123 = arith.constant dense<0.000000e+00> : vector<16x32xf32>
    %351 = tpu.matmul %348, %350, %cst_123 {dimension_numbers = #tpu.dot_dimension_numbers<[1], [0], [0], [1], [0, 0, 1, 1], [], []>} : vector<16x128xbf16>, vector<128x32xbf16>, vector<16x32xf32> -> vector<16x32xf32>
    %c15 = arith.constant 15 : index
    %c0_124 = arith.constant 0 : index
    %352 = vector.load %arg7[%c15, %c0_124] : memref<20x128xf32, #tpu.memory_space<vmem>>, vector<1x32xf32>
    %353 = vector.broadcast %352 : vector<1x32xf32> to vector<16x32xf32>
    %354 = arith.addf %351, %353 : vector<16x32xf32>
    %355 = arith.addf %354, %329 : vector<16x32xf32>
    %c16_125 = arith.constant 16 : index
    %c0_126 = arith.constant 0 : index
    %356 = vector.load %arg7[%c16_125, %c0_126] : memref<20x128xf32, #tpu.memory_space<vmem>>, vector<1x32xf32>
    %c17 = arith.constant 17 : index
    %c0_127 = arith.constant 0 : index
    %357 = vector.load %arg7[%c17, %c0_127] : memref<20x128xf32, #tpu.memory_space<vmem>>, vector<1x32xf32>
    %cst_128 = arith.constant dense<0.000000e+00> : vector<16xf32>
    %358 = vector.multi_reduction <add>, %355, %cst_128 [1] : vector<16x32xf32> to vector<16xf32>
    %359 = vector.shape_cast %358 : vector<16xf32> to vector<16x1xf32>
    %cst_129 = arith.constant 3.200000e+01 : f32
    %360 = vector.broadcast %cst_129 : f32 to vector<16x1xf32>
    %361 = arith.divf %359, %360 : vector<16x1xf32>
    %362 = vector.broadcast %361 : vector<16x1xf32> to vector<16x32xf32>
    %363 = arith.subf %355, %362 : vector<16x32xf32>
    %364 = arith.mulf %363, %363 : vector<16x32xf32>
    %cst_130 = arith.constant dense<0.000000e+00> : vector<16xf32>
    %365 = vector.multi_reduction <add>, %364, %cst_130 [1] : vector<16x32xf32> to vector<16xf32>
    %366 = vector.shape_cast %365 : vector<16xf32> to vector<16x1xf32>
    %cst_131 = arith.constant 3.200000e+01 : f32
    %367 = vector.broadcast %cst_131 : f32 to vector<16x1xf32>
    %368 = arith.divf %366, %367 : vector<16x1xf32>
    %369 = vector.broadcast %361 : vector<16x1xf32> to vector<16x32xf32>
    %370 = arith.subf %355, %369 : vector<16x32xf32>
    %cst_132 = arith.constant 9.99999996E-13 : f32
    %371 = vector.broadcast %cst_132 : f32 to vector<16x1xf32>
    %372 = arith.addf %368, %371 : vector<16x1xf32>
    %373 = math.rsqrt %372 : vector<16x1xf32>
    %374 = vector.broadcast %373 : vector<16x1xf32> to vector<16x32xf32>
    %375 = arith.mulf %370, %374 : vector<16x32xf32>
    %376 = vector.broadcast %356 : vector<1x32xf32> to vector<16x32xf32>
    %377 = arith.mulf %375, %376 : vector<16x32xf32>
    %378 = vector.broadcast %357 : vector<1x32xf32> to vector<16x32xf32>
    %379 = arith.addf %377, %378 : vector<16x32xf32>
    %380 = vector.shape_cast %379 : vector<16x32xf32> to vector<2x8x32xf32>
    %381 = vector.extract_strided_slice %380 {offsets = [0, 0, 0], sizes = [2, 1, 32], strides = [1, 1, 1]} : vector<2x8x32xf32> to vector<2x1x32xf32>
    %382 = vector.shape_cast %381 : vector<2x1x32xf32> to vector<2x32xf32>
    %c2_133 = arith.constant 2 : index
    %c0_134 = arith.constant 0 : index
    %c0_135 = arith.constant 0 : index
    %383 = vector.load %arg5[%c2_133, %c0_134, %c0_135] : memref<3x32x256xbf16, #tpu.memory_space<vmem>>, vector<1x32x256xbf16>
    %384 = vector.shape_cast %383 : vector<1x32x256xbf16> to vector<32x256xbf16>
    %385 = vector.extract_strided_slice %384 {offsets = [0, 0], sizes = [32, 32], strides = [1, 1]} : vector<32x256xbf16> to vector<32x32xbf16>
    %386 = vector.extract_strided_slice %384 {offsets = [0, 32], sizes = [32, 128], strides = [1, 1]} : vector<32x256xbf16> to vector<32x128xbf16>
    %387 = arith.truncf %382 : vector<2x32xf32> to vector<2x32xbf16>
    %cst_136 = arith.constant dense<0.000000e+00> : vector<2x32xf32>
    %388 = tpu.matmul %387, %385, %cst_136 {dimension_numbers = #tpu.dot_dimension_numbers<[1], [0], [0], [1], [0, 0, 1, 1], [], []>} : vector<2x32xbf16>, vector<32x32xbf16>, vector<2x32xf32> -> vector<2x32xf32>
    %c18 = arith.constant 18 : index
    %c0_137 = arith.constant 0 : index
    %389 = vector.load %arg7[%c18, %c0_137] : memref<20x128xf32, #tpu.memory_space<vmem>>, vector<1x32xf32>
    %390 = vector.broadcast %389 : vector<1x32xf32> to vector<2x32xf32>
    %391 = arith.addf %388, %390 : vector<2x32xf32>
    %392 = math.tanh %391 : vector<2x32xf32>
    %393 = arith.truncf %392 : vector<2x32xf32> to vector<2x32xbf16>
    %cst_138 = arith.constant dense<0.000000e+00> : vector<2x128xf32>
    %394 = tpu.matmul %393, %386, %cst_138 {dimension_numbers = #tpu.dot_dimension_numbers<[1], [0], [0], [1], [0, 0, 1, 1], [], []>} : vector<2x32xbf16>, vector<32x128xbf16>, vector<2x128xf32> -> vector<2x128xf32>
    %c19 = arith.constant 19 : index
    %c0_139 = arith.constant 0 : index
    %395 = vector.load %arg7[%c19, %c0_139] : memref<20x128xf32, #tpu.memory_space<vmem>>, vector<1x128xf32>
    %396 = vector.broadcast %395 : vector<1x128xf32> to vector<2x128xf32>
    %397 = arith.addf %394, %396 : vector<2x128xf32>
    %cst_140 = arith.constant dense<0xFF800000> : vector<2xf32>
    %398 = vector.multi_reduction <maximumf>, %397, %cst_140 [1] : vector<2x128xf32> to vector<2xf32>
    %399 = vector.shape_cast %398 : vector<2xf32> to vector<2x1xf32>
    %400 = vector.broadcast %399 : vector<2x1xf32> to vector<2x128xf32>
    %401 = arith.subf %397, %400 : vector<2x128xf32>
    %402 = math.exp %401 : vector<2x128xf32>
    %cst_141 = arith.constant dense<0.000000e+00> : vector<2xf32>
    %403 = vector.multi_reduction <add>, %402, %cst_141 [1] : vector<2x128xf32> to vector<2xf32>
    %404 = vector.shape_cast %403 : vector<2xf32> to vector<2x1xf32>
    %405 = math.log %404 : vector<2x1xf32>
    %406 = vector.broadcast %405 : vector<2x1xf32> to vector<2x128xf32>
    %407 = arith.subf %401, %406 : vector<2x128xf32>
    %c0_142 = arith.constant 0 : index
    %c0_143 = arith.constant 0 : index
    %408 = vector.load %arg8[%c0_142, %c0_143] : memref<2x128xf32, #tpu.memory_space<vmem>>, vector<2x128xf32>
    tpu.vector_store %arg8[%c0_142, %c0_143], %407 {strides = array<i32>} : memref<2x128xf32, #tpu.memory_space<vmem>>, vector<2x128xf32>,
    return
  }
  func.func @transform_0(%arg0: i32) -> (i32, i32) {
    %c0_i32 = arith.constant 0 : i32
    %c0_i32_0 = arith.constant 0 : i32
    %c0_i32_1 = arith.constant 0 : i32
    return %c0_i32, %c0_i32_0 : i32, i32
  }
  func.func @transform_1(%arg0: i32) -> (i32, i32) {
    %c0_i32 = arith.constant 0 : i32
    %c0_i32_0 = arith.constant 0 : i32
    %c0_i32_1 = arith.constant 0 : i32
    return %c0_i32, %c0_i32_0 : i32, i32
  }
  func.func @transform_2(%arg0: i32) -> (i32, i32) {
    %c0_i32 = arith.constant 0 : i32
    %c0_i32_0 = arith.constant 0 : i32
    %c0_i32_1 = arith.constant 0 : i32
    return %c0_i32, %c0_i32_0 : i32, i32
  }
  func.func @transform_3(%arg0: i32) -> (i32, i32) {
    %c0_i32 = arith.constant 0 : i32
    %c0_i32_0 = arith.constant 0 : i32
    %c0_i32_1 = arith.constant 0 : i32
    return %c0_i32, %c0_i32_0 : i32, i32
  }
  func.func @transform_4(%arg0: i32) -> (i32, i32, i32) {
    %c0_i32 = arith.constant 0 : i32
    %c0_i32_0 = arith.constant 0 : i32
    %c0_i32_1 = arith.constant 0 : i32
    %c0_i32_2 = arith.constant 0 : i32
    return %c0_i32, %c0_i32_0, %c0_i32_1 : i32, i32, i32
  }
  func.func @transform_5(%arg0: i32) -> (i32, i32, i32) {
    %c0_i32 = arith.constant 0 : i32
    %c0_i32_0 = arith.constant 0 : i32
    %c0_i32_1 = arith.constant 0 : i32
    %c0_i32_2 = arith.constant 0 : i32
    return %c0_i32, %c0_i32_0, %c0_i32_1 : i32, i32, i32
  }
  func.func @transform_6(%arg0: i32) -> (i32, i32) {
    %c0_i32 = arith.constant 0 : i32
    %c0_i32_0 = arith.constant 0 : i32
    %c0_i32_1 = arith.constant 0 : i32
    return %c0_i32, %c0_i32_0 : i32, i32
  }
  func.func @transform_7(%arg0: i32) -> (i32, i32) {
    %c0_i32 = arith.constant 0 : i32
    %c0_i32_0 = arith.constant 0 : i32
    %c0_i32_1 = arith.constant 0 : i32
    return %c0_i32, %c0_i32_0 : i32, i32
  }
}

</mosaic_0001>

<llo_original>
// kernel: my_model_forward.1
$region0: #{my_model_forward.1}
  #allocation0 [shape = 'u32[]', space=smem, size = 0x4, offset = 0x4, fixed_abs, tag = 'smem constant byte address 0x4 - core index']
  #allocation1 [shape = 'u32[72,128]{1,0:T(1,128)}', space=vmem, size = 0x9000, scoped, tag = 'internal scratch']
  #allocation2 [shape = 'f32[16,32]{1,0:T(8,128)}', space=vmem, size = 0x2000, scoped, tag = 'scratch operand']
  %s0 = inlined_call_operand.vmem [shape: s32[16,1], index: 0, kind: input, shape index: {}]
  %s1 = inlined_call_operand.vmem [shape: f32[2,8], index: 1, kind: input, shape index: {}]
  %s2 = inlined_call_operand.vmem [shape: bf16[128,32], index: 2, kind: input, shape index: {}]
  %s3 = inlined_call_operand.vmem [shape: f32[8,32], index: 3, kind: input, shape index: {}]
  %s4 = inlined_call_operand.vmem [shape: bf16[3,32,256], index: 4, kind: input, shape index: {}]
  %s5 = inlined_call_operand.vmem [shape: bf16[2,128,32], index: 5, kind: input, shape index: {}]
  %s6 = inlined_call_operand.vmem [shape: f32[20,128], index: 6, kind: input, shape index: {}]
  %s7 = inlined_call_operand.hbm [shape: f32[2,128], index: 7, kind: output, shape index: {}]
  %s8 = sld [smem:[#allocation0]]
  $region38: #{my_model_forward.1} parent=0
    _
  %s10 = ssub.s32 1, %s8
  %s11 = scalar_select 0, %s10, %s8
  $region1: #{my_model_forward.1} parent=0
    #allocation3 [shape = 'u8[1024]{0}', space=vmem, size = 0x400, scoped, tag = 'output window, operand 0, single buffered']
    #allocation4 [shape = 's32[1]{0}', space=sflag, size = 0x4, scoped, tag = 'scoped memory for my_model_forward.1']
    %12 = vsyncpa [#allocation4], 0
    // Predicated region
    $region2: #{my_model_forward.1} parent=1 // pred_check
      _
    $region3: #{my_model_forward.1} parent=1 // pred_check_branch
      %14 = sbr.rel (0) target = $region5
    $region4: #{my_model_forward.1} parent=1 // pred_region
      _
    $region5: #{my_model_forward.1} parent=1 // pred_fallthru
      _
    // Predicated region
    $region6: #{my_model_forward.1} parent=1 // pred_check
      _
    $region7: #{my_model_forward.1} parent=1 // pred_check_branch
      %16 = sbr.rel (0) target = $region9
    $region8: #{my_model_forward.1} parent=1 // pred_region
      _
    $region9: #{my_model_forward.1} parent=1 // pred_fallthru
      _
    // Predicated region
    $region10: #{my_model_forward.1} parent=1 // pred_check
      _
    $region11: #{my_model_forward.1} parent=1 // pred_check_branch
      %18 = sbr.rel (0) target = $region13
    $region12: #{my_model_forward.1} parent=1 // pred_region
      _
    $region13: #{my_model_forward.1} parent=1 // pred_fallthru
      _
    // Predicated region
    $region14: #{my_model_forward.1} parent=1 // pred_check
      _
    $region15: #{my_model_forward.1} parent=1 // pred_check_branch
      %20 = sbr.rel (0) target = $region17
    $region16: #{my_model_forward.1} parent=1 // pred_region
      _
    $region17: #{my_model_forward.1} parent=1 // pred_fallthru
      _
    // Predicated region
    $region18: #{my_model_forward.1} parent=1 // pred_check
      _
    $region19: #{my_model_forward.1} parent=1 // pred_check_branch
      %22 = sbr.rel (0) target = $region21
    $region20: #{my_model_forward.1} parent=1 // pred_region
      _
    $region21: #{my_model_forward.1} parent=1 // pred_fallthru
      _
    // Predicated region
    $region22: #{my_model_forward.1} parent=1 // pred_check
      _
    $region23: #{my_model_forward.1} parent=1 // pred_check_branch
      %24 = sbr.rel (0) target = $region25
    $region24: #{my_model_forward.1} parent=1 // pred_region
      _
    $region25: #{my_model_forward.1} parent=1 // pred_fallthru
      _
    // Predicated region
    $region26: #{my_model_forward.1} parent=1 // pred_check
      _
    $region27: #{my_model_forward.1} parent=1 // pred_check_branch
      %26 = sbr.rel (0) target = $region29
    $region28: #{my_model_forward.1} parent=1 // pred_region
      _
    $region29: #{my_model_forward.1} parent=1 // pred_fallthru
      _
    %v28 = vld [vmem:[%s0] sm:$0xff]
    %v29 = vld [vmem:[%s0 + $0x8] sm:$0xff]
    %v30 = vlaneseq
    %v31 = vand.u32 %v30, 127
    %32 = vset.pattern.permute.xlu0 0
    %33 = vperm.xlu0 %32, %v28
    %v34 = vpop.permute.xlu0 %33
    %35 = vset.pattern.permute.xlu0 0
    %36 = vperm.xlu0 %35, %v29
    %v37 = vpop.permute.xlu0 %36
    %vm38 = vcmp.eq.s32.totalorder %v31, %v34
    %vm39 = vcmp.eq.s32.totalorder %v31, %v37
    %v40 = vsel %vm38, 1, 0
    %v41 = vsel %vm39, 1, 0
    %v42 = vcvt.s32.f32 %v40
    %v43 = vcvt.s32.f32 %v41
    %v44 = vpack.c.bf16 %v43, %v42
    %v45 = vld [vmem:[%s2] sm:$0xf]
    %v46 = vld [vmem:[%s2 + $0x4] sm:$0xf]
    %v47 = vld [vmem:[%s2 + $0x8] sm:$0xf]
    %v48 = vld [vmem:[%s2 + $0xc] sm:$0xf]
    %v49 = vld [vmem:[%s2 + $0x10] sm:$0xf]
    %v50 = vld [vmem:[%s2 + $0x14] sm:$0xf]
    %v51 = vld [vmem:[%s2 + $0x18] sm:$0xf]
    %v52 = vld [vmem:[%s2 + $0x1c] sm:$0xf]
    %v53 = vld [vmem:[%s2 + $0x20] sm:$0xf]
    %v54 = vld [vmem:[%s2 + $0x24] sm:$0xf]
    %v55 = vld [vmem:[%s2 + $0x28] sm:$0xf]
    %v56 = vld [vmem:[%s2 + $0x2c] sm:$0xf]
    %v57 = vld [vmem:[%s2 + $0x30] sm:$0xf]
    %v58 = vld [vmem:[%s2 + $0x34] sm:$0xf]
    %v59 = vld [vmem:[%s2 + $0x38] sm:$0xf]
    %v60 = vld [vmem:[%s2 + $0x3c] sm:$0xf]
    %v77 = vunpack.c.l.b16 %v45
    %v78 = vunpack.c.l.b16 %v46
    %v79 = vunpack.c.l.b16 %v47
    %v80 = vunpack.c.l.b16 %v48
    %v81 = vunpack.c.l.b16 %v49
    %v82 = vunpack.c.l.b16 %v50
    %v83 = vunpack.c.l.b16 %v51
    %v84 = vunpack.c.l.b16 %v52
    %v85 = vunpack.c.l.b16 %v53
    %v86 = vunpack.c.l.b16 %v54
    %v87 = vunpack.c.l.b16 %v55
    %v88 = vunpack.c.l.b16 %v56
    %v89 = vunpack.c.l.b16 %v57
    %v90 = vunpack.c.l.b16 %v58
    %v91 = vunpack.c.l.b16 %v59
    %v92 = vunpack.c.l.b16 %v60
    %v93 = vpack.c.b16 %v78, %v77
    %v94 = vpack.c.b16 %v80, %v79
    %v95 = vpack.c.b16 %v82, %v81
    %v96 = vpack.c.b16 %v84, %v83
    %v97 = vpack.c.b16 %v86, %v85
    %v98 = vpack.c.b16 %v88, %v87
    %v99 = vpack.c.b16 %v90, %v89
    %v100 = vpack.c.b16 %v92, %v91
    %109 = vmatpush.bf16.msra.mxu0 %v100
    %110 = vmatpush.bf16.msra.mxu0 %v99
    %111 = vmatpush.bf16.msra.mxu0 %v98
    %112 = vmatpush.bf16.msra.mxu0 %v97
    %113 = vmatpush.bf16.msra.mxu0 %v96
    %114 = vmatpush.bf16.msra.mxu0 %v95
    %115 = vmatpush.bf16.msra.mxu0 %v94
    %116 = vmatpush.bf16.msra.mxu0 %v93
    %117 = vmatmul.bf16.gmra.mxu0 %v44
    %v118 = vpop.f32.mrf.mxu0
    %v119 = vadd.f32 0.0, %v118
    %v120 = vpop.f32.mrf.mxu0
    %v121 = vadd.f32 0.0, %v120
    %122 = vdwg.mxu0
    %v123 = vld [vmem:[%s3] sm:$0xff]
    %v124 = vadd.f32 %v119, %v123
    %v125 = vadd.f32 %v121, %v123
    %v126 = vld [vmem:[%s6] sm:$0x1]
    %v127 = vld [vmem:[%s6 + $0x1] sm:$0x1]
    %vm128 = vcmask 261120
    %v129 = vsel %vm128, %v124, 0.0
    %130 = vadd.xlane.f32.xlu0 %v129
    %v131 = vpop.xlane.xlu0 %130
    %v132 = vsel %vm128, %v125, 0.0
    %133 = vadd.xlane.f32.xlu0 %v132
    %v134 = vpop.xlane.xlu0 %133
    %v135 = vrcp.pop 32.0
    %v136 = vmul.f32 32.0, %v135
    %v137 = vsub.f32 1.0, %v136
    %v138 = vmul.f32 %v135, %v137
    %v139 = vadd.f32 %v135, %v138
    %vm140 = vweird.f32 %v135
    %v141 = vsel %vm140, %v135, %v139
    %v142 = vmul.f32 %v131, %v141
    %v143 = vmul.f32 %v134, %v141
    %v144 = vsub.f32 %v124, %v142
    %v145 = vsub.f32 %v125, %v143
    %v146 = vmul.f32 %v144, %v144
    %v147 = vmul.f32 %v145, %v145
    %v148 = vsel %vm128, %v146, 0.0
    %149 = vadd.xlane.f32.xlu0 %v148
    %v150 = vpop.xlane.xlu0 %149
    %v151 = vsel %vm128, %v147, 0.0
    %152 = vadd.xlane.f32.xlu0 %v151
    %v153 = vpop.xlane.xlu0 %152
    %v154 = vmul.f32 %v150, %v141
    %v155 = vmul.f32 %v153, %v141
    %v156 = vadd.f32 %v154, 1e-12
    %v157 = vadd.f32 %v155, 1e-12
    %v158 = vrsqrt.pop %v156
    %v159 = vmul.f32 %v158, %v156
    %v160 = vmul.f32 %v159, %v158
    %v161 = vmul.f32 0.5, %v160
    %v162 = vsub.f32 1.5, %v161
    %v163 = vmul.f32 %v158, %v162
    %vm164 = vweird.f32 %v156
    %vm165 = vweird.f32 %v158
    %vm166 = vmor %vm164, %vm165
    %v167 = vsel %vm166, %v158, %v163
    %v168 = vrsqrt.pop %v157
    %v169 = vmul.f32 %v168, %v157
    %v170 = vmul.f32 %v169, %v168
    %v171 = vmul.f32 0.5, %v170
    %v172 = vsub.f32 1.5, %v171
    %v173 = vmul.f32 %v168, %v172
    %vm174 = vweird.f32 %v157
    %vm175 = vweird.f32 %v168
    %vm176 = vmor %vm174, %vm175
    %v177 = vsel %vm176, %v168, %v173
    %v178 = vmul.f32 %v144, %v167
    %v179 = vmul.f32 %v145, %v177
    %v180 = vperm.slane %v126, 0
    %v181 = vmul.f32 %v178, %v180
    %v182 = vmul.f32 %v179, %v180
    %v183 = vperm.slane %v127, 0
    %v184 = vadd.f32 %v181, %v183
    %v185 = vadd.f32 %v182, %v183
    %v186 = vld [vmem:[%s1] sm:$0x3]
    %v187 = vsub.f32 1.0, %v186
    %v188 = vmul.f32 %v187, -10000.0
    %v189 = vld [vmem:[%s4] sm:$0xff]
    %v190 = vld [vmem:[%s4 + $0x8] sm:$0xff]
    %v191 = vld [vmem:[%s4 + $0x10] sm:$0xff]
    %v192 = vld [vmem:[%s4 + $0x18] sm:$0xff]
    %v193 = vpack.c.bf16 %v185, %v184
    %v194 = vld [vmem:[%s6 + $0x2] sm:$0x1]
    %v195 = vperm.slane %v194, 0
    %v200 = vunpack.c.l.b16 %v189
    %v201 = vunpack.c.l.b16 %v190
    %v202 = vunpack.c.l.b16 %v191
    %v203 = vunpack.c.l.b16 %v192
    %v204 = vpack.c.b16 %v201, %v200
    %v205 = vpack.c.b16 %v203, %v202
    %v209 = vsel %vm128, %v193, 0
    %211 = vmatpush.bf16.msra.mxu0 0
    %212 = vmatpush.bf16.msra.mxu0 0
    %213 = vmatpush.bf16.msra.mxu0 0
    %214 = vmatpush.bf16.msra.mxu0 0
    %215 = vmatpush.bf16.msra.mxu0 0
    %216 = vmatpush.bf16.msra.mxu0 0
    %217 = vmatpush.bf16.msra.mxu0 %v205
    %218 = vmatpush.bf16.msra.mxu0 %v204
    %219 = vmatmul.bf16.gmra.mxu0 %v209
    %v220 = vpop.f32.mrf.mxu0
    %v221 = vadd.f32 %v195, %v220
    %v222 = vpop.f32.mrf.mxu0
    %v223 = vadd.f32 %v195, %v222
    %224 = vdwg.mxu0
    %v225 = vperm.slane %v188, 0
    %227 = vrot.lane.b32.xlu0 %v221, 96
    %v228 = vpop.permute.xlu0 %227
    %vm229 = vcmask 130048
    %v230 = vsel %vm229, %v221, 0
    %v232 = vsel %vm229, %v228, 0
    %234 = vmatpush.xpose.msra.mxu0 0.0
    %235 = vmatpush.xpose.msra.mxu0 0.0
    %236 = vmatpush.xpose.msra.mxu0 0.0
    %237 = vmatpush.xpose.msra.mxu0 0.0
    %238 = vmatpush.xpose.msra.mxu0 0.0
    %239 = vmatpush.xpose.msra.mxu0 0.0
    %240 = vmatpush.xpose.msra.mxu0 0.0
    %241 = vmatpush.xpose.msra.mxu0 0.0
    %242 = vmatpush.xpose.msra.mxu0 0.0
    %243 = vmatpush.xpose.msra.mxu0 0.0
    %244 = vmatpush.xpose.msra.mxu0 0.0
    %245 = vmatpush.xpose.msra.mxu0 0.0
    %246 = vmatpush.xpose.msra.mxu0 0.0
    %247 = vmatpush.xpose.msra.mxu0 0.0
    %248 = vmatpush.xpose.msra.mxu0 0.0
    %249 = vmatpush.xpose.msra.mxu0 %v232
    %250 = vmatmul.f32.gmra.mxu0 %v230
    %v251 = vpop.f32.mrf.mxu0
    %v252 = vadd.f32 %v225, %v251
    %253 = vdwg.mxu0
    %vm254 = vcmask 64512
    %v255 = vsel %vm254, %v252, -inf
    %256 = vmax.xlane.f32.xlu0 %v255
    %v257 = vpop.xlane.xlu0 %256
    %v258 = vsub.f32 %v252, %v257
    %v259 = vmul.f32 %v258, 1.442695
    %v260 = vpow.pop %v259
    %v261 = vsel %vm254, %v260, 0.0
    %262 = vadd.xlane.f32.xlu0 %v261
    %v263 = vpop.xlane.xlu0 %262
    %v264 = vrcp.pop %v263
    %v265 = vmul.f32 %v263, %v264
    %v266 = vsub.f32 1.0, %v265
    %v267 = vmul.f32 %v264, %v266
    %v268 = vadd.f32 %v264, %v267
    %vm269 = vweird.f32 %v263
    %vm270 = vweird.f32 %v264
    %vm271 = vmor %vm269, %vm270
    %v272 = vsel %vm271, %v264, %v268
    %v273 = vand.u32 2147483647, %v263
    %vm274 = vcmp.eq.f32.partialorder %v273, 8.507059e+37
    %v275 = vand.u32 %v263, 2147483648
    %v276 = vor.u32 1.1754944e-38, %v275
    %v277 = vsel %vm274, %v276, %v272
    %v278 = vmul.f32 %v260, %v277
    %279 = vrot.lane.b32.xlu0 %v221, 64
    %v280 = vpop.permute.xlu0 %279
    %v283 = vsel %vm254, %v278, 0
    %285 = vmatpush.msra.mxu0 0.0
    %286 = vmatpush.msra.mxu0 0.0
    %287 = vmatpush.msra.mxu0 0.0
    %288 = vmatpush.msra.mxu0 0.0
    %289 = vmatpush.msra.mxu0 0.0
    %290 = vmatpush.msra.mxu0 0.0
    %291 = vmatpush.msra.mxu0 0.0
    %292 = vmatpush.msra.mxu0 0.0
    %293 = vmatpush.msra.mxu0 0.0
    %294 = vmatpush.msra.mxu0 0.0
    %295 = vmatpush.msra.mxu0 0.0
    %296 = vmatpush.msra.mxu0 0.0
    %297 = vmatpush.msra.mxu0 0.0
    %298 = vmatpush.msra.mxu0 0.0
    %299 = vmatpush.msra.mxu0 0.0
    %300 = vmatpush.msra.mxu0 %v280
    %301 = vmatmul.f32.gmra.mxu0 %v283
    %v302 = vpop.f32.mrf.mxu0
    %v303 = vadd.f32 0.0, %v302
    %304 = vdwg.mxu0
    %305 = vst.msk [vmem:[#allocation2] sm:$0xff] %vm229, %v303
    %306 = vrot.lane.b32.xlu0 %v221, 112
    %v307 = vpop.permute.xlu0 %306
    %308 = vrot.lane.b32.xlu0 %v221, 80
    %v309 = vpop.permute.xlu0 %308
    %v310 = vsel %vm229, %v307, 0
    %v312 = vsel %vm229, %v309, 0
    %314 = vmatpush.xpose.msra.mxu0 0.0
    %315 = vmatpush.xpose.msra.mxu0 0.0
    %316 = vmatpush.xpose.msra.mxu0 0.0
    %317 = vmatpush.xpose.msra.mxu0 0.0
    %318 = vmatpush.xpose.msra.mxu0 0.0
    %319 = vmatpush.xpose.msra.mxu0 0.0
    %320 = vmatpush.xpose.msra.mxu0 0.0
    %321 = vmatpush.xpose.msra.mxu0 0.0
    %322 = vmatpush.xpose.msra.mxu0 0.0
    %323 = vmatpush.xpose.msra.mxu0 0.0
    %324 = vmatpush.xpose.msra.mxu0 0.0
    %325 = vmatpush.xpose.msra.mxu0 0.0
    %326 = vmatpush.xpose.msra.mxu0 0.0
    %327 = vmatpush.xpose.msra.mxu0 0.0
    %328 = vmatpush.xpose.msra.mxu0 0.0
    %329 = vmatpush.xpose.msra.mxu0 %v312
    %330 = vmatmul.f32.gmra.mxu0 %v310
    %v331 = vpop.f32.mrf.mxu0
    %v332 = vadd.f32 %v225, %v331
    %333 = vdwg.mxu0
    %v334 = vsel %vm254, %v332, -inf
    %335 = vmax.xlane.f32.xlu0 %v334
    %v336 = vpop.xlane.xlu0 %335
    %v337 = vsub.f32 %v332, %v336
    %v338 = vmul.f32 %v337, 1.442695
    %v339 = vpow.pop %v338
    %v340 = vsel %vm254, %v339, 0.0
    %341 = vadd.xlane.f32.xlu0 %v340
    %v342 = vpop.xlane.xlu0 %341
    %v343 = vrcp.pop %v342
    %v344 = vmul.f32 %v342, %v343
    %v345 = vsub.f32 1.0, %v344
    %v346 = vmul.f32 %v343, %v345
    %v347 = vadd.f32 %v343, %v346
    %vm348 = vweird.f32 %v342
    %vm349 = vweird.f32 %v343
    %vm350 = vmor %vm348, %vm349
    %v351 = vsel %vm350, %v343, %v347
    %v352 = vand.u32 2147483647, %v342
    %vm353 = vcmp.eq.f32.partialorder %v352, 8.507059e+37
    %v354 = vand.u32 %v342, 2147483648
    %v355 = vor.u32 1.1754944e-38, %v354
    %v356 = vsel %vm353, %v355, %v351
    %v357 = vmul.f32 %v339, %v356
    %358 = vrot.lane.b32.xlu0 %v221, 48
    %v359 = vpop.permute.xlu0 %358
    %v362 = vsel %vm254, %v357, 0
    %364 = vmatpush.msra.mxu0 0.0
    %365 = vmatpush.msra.mxu0 0.0
    %366 = vmatpush.msra.mxu0 0.0
    %367 = vmatpush.msra.mxu0 0.0
    %368 = vmatpush.msra.mxu0 0.0
    %369 = vmatpush.msra.mxu0 0.0
    %370 = vmatpush.msra.mxu0 0.0
    %371 = vmatpush.msra.mxu0 0.0
    %372 = vmatpush.msra.mxu0 0.0
    %373 = vmatpush.msra.mxu0 0.0
    %374 = vmatpush.msra.mxu0 0.0
    %375 = vmatpush.msra.mxu0 0.0
    %376 = vmatpush.msra.mxu0 0.0
    %377 = vmatpush.msra.mxu0 0.0
    %378 = vmatpush.msra.mxu0 0.0
    %379 = vmatpush.msra.mxu0 %v359
    %380 = vmatmul.f32.gmra.mxu0 %v362
    %v381 = vpop.f32.mrf.mxu0
    %v382 = vadd.f32 0.0, %v381
    %383 = vdwg.mxu0
    %385 = vrot.lane.b32.xlu0 %v382, 16
    %v386 = vpop.permute.xlu0 %385
    %vm388 = vcmask 261248
    %389 = vst.msk [vmem:[#allocation2] sm:$0xff] %vm388, %v386
    %v390 = vperm.slane %v188, 1
    %392 = vrot.lane.b32.xlu0 %v223, 96
    %v393 = vpop.permute.xlu0 %392
    %v394 = vsel %vm229, %v223, 0
    %v396 = vsel %vm229, %v393, 0
    %398 = vmatpush.xpose.msra.mxu0 0.0
    %399 = vmatpush.xpose.msra.mxu0 0.0
    %400 = vmatpush.xpose.msra.mxu0 0.0
    %401 = vmatpush.xpose.msra.mxu0 0.0
    %402 = vmatpush.xpose.msra.mxu0 0.0
    %403 = vmatpush.xpose.msra.mxu0 0.0
    %404 = vmatpush.xpose.msra.mxu0 0.0
    %405 = vmatpush.xpose.msra.mxu0 0.0
    %406 = vmatpush.xpose.msra.mxu0 0.0
    %407 = vmatpush.xpose.msra.mxu0 0.0
    %408 = vmatpush.xpose.msra.mxu0 0.0
    %409 = vmatpush.xpose.msra.mxu0 0.0
    %410 = vmatpush.xpose.msra.mxu0 0.0
    %411 = vmatpush.xpose.msra.mxu0 0.0
    %412 = vmatpush.xpose.msra.mxu0 0.0
    %413 = vmatpush.xpose.msra.mxu0 %v396
    %414 = vmatmul.f32.gmra.mxu0 %v394
    %v415 = vpop.f32.mrf.mxu0
    %v416 = vadd.f32 %v390, %v415
    %417 = vdwg.mxu0
    %v418 = vsel %vm254, %v416, -inf
    %419 = vmax.xlane.f32.xlu0 %v418
    %v420 = vpop.xlane.xlu0 %419
    %v421 = vsub.f32 %v416, %v420
    %v422 = vmul.f32 %v421, 1.442695
    %v423 = vpow.pop %v422
    %v424 = vsel %vm254, %v423, 0.0
    %425 = vadd.xlane.f32.xlu0 %v424
    %v426 = vpop.xlane.xlu0 %425
    %v427 = vrcp.pop %v426
    %v428 = vmul.f32 %v426, %v427
    %v429 = vsub.f32 1.0, %v428
    %v430 = vmul.f32 %v427, %v429
    %v431 = vadd.f32 %v427, %v430
    %vm432 = vweird.f32 %v426
    %vm433 = vweird.f32 %v427
    %vm434 = vmor %vm432, %vm433
    %v435 = vsel %vm434, %v427, %v431
    %v436 = vand.u32 2147483647, %v426
    %vm437 = vcmp.eq.f32.partialorder %v436, 8.507059e+37
    %v438 = vand.u32 %v426, 2147483648
    %v439 = vor.u32 1.1754944e-38, %v438
    %v440 = vsel %vm437, %v439, %v435
    %v441 = vmul.f32 %v423, %v440
    %442 = vrot.lane.b32.xlu0 %v223, 64
    %v443 = vpop.permute.xlu0 %442
    %v446 = vsel %vm254, %v441, 0
    %448 = vmatpush.msra.mxu0 0.0
    %449 = vmatpush.msra.mxu0 0.0
    %450 = vmatpush.msra.mxu0 0.0
    %451 = vmatpush.msra.mxu0 0.0
    %452 = vmatpush.msra.mxu0 0.0
    %453 = vmatpush.msra.mxu0 0.0
    %454 = vmatpush.msra.mxu0 0.0
    %455 = vmatpush.msra.mxu0 0.0
    %456 = vmatpush.msra.mxu0 0.0
    %457 = vmatpush.msra.mxu0 0.0
    %458 = vmatpush.msra.mxu0 0.0
    %459 = vmatpush.msra.mxu0 0.0
    %460 = vmatpush.msra.mxu0 0.0
    %461 = vmatpush.msra.mxu0 0.0
    %462 = vmatpush.msra.mxu0 0.0
    %463 = vmatpush.msra.mxu0 %v443
    %464 = vmatmul.f32.gmra.mxu0 %v446
    %v465 = vpop.f32.mrf.mxu0
    %v466 = vadd.f32 0.0, %v465
    %467 = vdwg.mxu0
    %468 = vst.msk [vmem:[#allocation2 + $0x8] sm:$0xff] %vm229, %v466
    %469 = vrot.lane.b32.xlu0 %v223, 112
    %v470 = vpop.permute.xlu0 %469
    %471 = vrot.lane.b32.xlu0 %v223, 80
    %v472 = vpop.permute.xlu0 %471
    %v473 = vsel %vm229, %v470, 0
    %v475 = vsel %vm229, %v472, 0
    %477 = vmatpush.xpose.msra.mxu0 0.0
    %478 = vmatpush.xpose.msra.mxu0 0.0
    %479 = vmatpush.xpose.msra.mxu0 0.0
    %480 = vmatpush.xpose.msra.mxu0 0.0
    %481 = vmatpush.xpose.msra.mxu0 0.0
    %482 = vmatpush.xpose.msra.mxu0 0.0
    %483 = vmatpush.xpose.msra.mxu0 0.0
    %484 = vmatpush.xpose.msra.mxu0 0.0
    %485 = vmatpush.xpose.msra.mxu0 0.0
    %486 = vmatpush.xpose.msra.mxu0 0.0
    %487 = vmatpush.xpose.msra.mxu0 0.0
    %488 = vmatpush.xpose.msra.mxu0 0.0
    %489 = vmatpush.xpose.msra.mxu0 0.0
    %490 = vmatpush.xpose.msra.mxu0 0.0
    %491 = vmatpush.xpose.msra.mxu0 0.0
    %492 = vmatpush.xpose.msra.mxu0 %v475
    %493 = vmatmul.f32.gmra.mxu0 %v473
    %v494 = vpop.f32.mrf.mxu0
    %v495 = vadd.f32 %v390, %v494
    %496 = vdwg.mxu0
    %v497 = vsel %vm254, %v495, -inf
    %498 = vmax.xlane.f32.xlu0 %v497
    %v499 = vpop.xlane.xlu0 %498
    %v500 = vsub.f32 %v495, %v499
    %v501 = vmul.f32 %v500, 1.442695
    %v502 = vpow.pop %v501
    %v503 = vsel %vm254, %v502, 0.0
    %504 = vadd.xlane.f32.xlu0 %v503
    %v505 = vpop.xlane.xlu0 %504
    %v506 = vrcp.pop %v505
    %v507 = vmul.f32 %v505, %v506
    %v508 = vsub.f32 1.0, %v507
    %v509 = vmul.f32 %v506, %v508
    %v510 = vadd.f32 %v506, %v509
    %vm511 = vweird.f32 %v505
    %vm512 = vweird.f32 %v506
    %vm513 = vmor %vm511, %vm512
    %v514 = vsel %vm513, %v506, %v510
    %v515 = vand.u32 2147483647, %v505
    %vm516 = vcmp.eq.f32.partialorder %v515, 8.507059e+37
    %v517 = vand.u32 %v505, 2147483648
    %v518 = vor.u32 1.1754944e-38, %v517
    %v519 = vsel %vm516, %v518, %v514
    %v520 = vmul.f32 %v502, %v519
    %521 = vrot.lane.b32.xlu0 %v223, 48
    %v522 = vpop.permute.xlu0 %521
    %v525 = vsel %vm254, %v520, 0
    %527 = vmatpush.msra.mxu0 0.0
    %528 = vmatpush.msra.mxu0 0.0
    %529 = vmatpush.msra.mxu0 0.0
    %530 = vmatpush.msra.mxu0 0.0
    %531 = vmatpush.msra.mxu0 0.0
    %532 = vmatpush.msra.mxu0 0.0
    %533 = vmatpush.msra.mxu0 0.0
    %534 = vmatpush.msra.mxu0 0.0
    %535 = vmatpush.msra.mxu0 0.0
    %536 = vmatpush.msra.mxu0 0.0
    %537 = vmatpush.msra.mxu0 0.0
    %538 = vmatpush.msra.mxu0 0.0
    %539 = vmatpush.msra.mxu0 0.0
    %540 = vmatpush.msra.mxu0 0.0
    %541 = vmatpush.msra.mxu0 0.0
    %542 = vmatpush.msra.mxu0 %v522
    %543 = vmatmul.f32.gmra.mxu0 %v525
    %v544 = vpop.f32.mrf.mxu0
    %v545 = vadd.f32 0.0, %v544
    %546 = vdwg.mxu0
    %548 = vrot.lane.b32.xlu0 %v545, 16
    %v549 = vpop.permute.xlu0 %548
    %551 = vst.msk [vmem:[#allocation2 + $0x8] sm:$0xff] %vm388, %v549
    %v552 = vld [vmem:[#allocation2] sm:$0xff]
    %v553 = vld [vmem:[#allocation2 + $0x8] sm:$0xff]
    %v554 = vpack.c.bf16 %v553, %v552
    %v555 = vld [vmem:[%s6 + $0x3] sm:$0x1]
    %v556 = vperm.slane %v555, 0
    %557 = vrot.lane.b32.xlu0 %v204, 32
    %v558 = vpop.permute.xlu0 %557
    %559 = vrot.lane.b32.xlu0 %v205, 32
    %v560 = vpop.permute.xlu0 %559
    %v564 = vsel %vm128, %v554, 0
    %566 = vmatpush.bf16.msra.mxu0 0
    %567 = vmatpush.bf16.msra.mxu0 0
    %568 = vmatpush.bf16.msra.mxu0 0
    %569 = vmatpush.bf16.msra.mxu0 0
    %570 = vmatpush.bf16.msra.mxu0 0
    %571 = vmatpush.bf16.msra.mxu0 0
    %572 = vmatpush.bf16.msra.mxu0 %v560
    %573 = vmatpush.bf16.msra.mxu0 %v558
    %574 = vmatmul.bf16.gmra.mxu0 %v564
    %v575 = vpop.f32.mrf.mxu0
    %v576 = vadd.f32 %v556, %v575
    %v577 = vpop.f32.mrf.mxu0
    %v578 = vadd.f32 %v556, %v577
    %579 = vdwg.mxu0
    %v580 = vadd.f32 %v576, %v184
    %v581 = vadd.f32 %v578, %v185
    %v582 = vld [vmem:[%s6 + $0x4] sm:$0x1]
    %v583 = vld [vmem:[%s6 + $0x5] sm:$0x1]
    %v584 = vsel %vm128, %v580, 0.0
    %585 = vadd.xlane.f32.xlu0 %v584
    %v586 = vpop.xlane.xlu0 %585
    %v587 = vsel %vm128, %v581, 0.0
    %588 = vadd.xlane.f32.xlu0 %v587
    %v589 = vpop.xlane.xlu0 %588
    %v590 = vmul.f32 %v586, %v141
    %v591 = vmul.f32 %v589, %v141
    %v592 = vsub.f32 %v580, %v590
    %v593 = vsub.f32 %v581, %v591
    %v594 = vmul.f32 %v592, %v592
    %v595 = vmul.f32 %v593, %v593
    %v596 = vsel %vm128, %v594, 0.0
    %597 = vadd.xlane.f32.xlu0 %v596
    %v598 = vpop.xlane.xlu0 %597
    %v599 = vsel %vm128, %v595, 0.0
    %600 = vadd.xlane.f32.xlu0 %v599
    %v601 = vpop.xlane.xlu0 %600
    %v602 = vmul.f32 %v598, %v141
    %v603 = vmul.f32 %v601, %v141
    %v604 = vadd.f32 %v602, 1e-12
    %v605 = vadd.f32 %v603, 1e-12
    %v606 = vrsqrt.pop %v604
    %v607 = vmul.f32 %v606, %v604
    %v608 = vmul.f32 %v607, %v606
    %v609 = vmul.f32 0.5, %v608
    %v610 = vsub.f32 1.5, %v609
    %v611 = vmul.f32 %v606, %v610
    %vm612 = vweird.f32 %v604
    %vm613 = vweird.f32 %v606
    %vm614 = vmor %vm612, %vm613
    %v615 = vsel %vm614, %v606, %v611
    %v616 = vrsqrt.pop %v605
    %v617 = vmul.f32 %v616, %v605
    %v618 = vmul.f32 %v617, %v616
    %v619 = vmul.f32 0.5, %v618
    %v620 = vsub.f32 1.5, %v619
    %v621 = vmul.f32 %v616, %v620
    %vm622 = vweird.f32 %v605
    %vm623 = vweird.f32 %v616
    %vm624 = vmor %vm622, %vm623
    %v625 = vsel %vm624, %v616, %v621
    %v626 = vmul.f32 %v592, %v615
    %v627 = vmul.f32 %v593, %v625
    %v628 = vperm.slane %v582, 0
    %v629 = vmul.f32 %v626, %v628
    %v630 = vmul.f32 %v627, %v628
    %v631 = vperm.slane %v583, 0
    %v632 = vadd.f32 %v629, %v631
    %v633 = vadd.f32 %v630, %v631
    %v634 = vpack.c.bf16 %v633, %v632
    %v635 = vld [vmem:[%s6 + $0x6] sm:$0x1]
    %v636 = vperm.slane %v635, 0
    %v637 = vunpack.c.h.b16 %v189
    %v638 = vunpack.c.h.b16 %v190
    %v639 = vunpack.c.h.b16 %v191
    %v640 = vunpack.c.h.b16 %v192
    %v641 = vpack.c.b16 %v638, %v637
    %v642 = vpack.c.b16 %v640, %v639
    %v646 = vsel %vm128, %v634, 0
    %648 = vmatpush.bf16.msra.mxu0 0
    %649 = vmatpush.bf16.msra.mxu0 0
    %650 = vmatpush.bf16.msra.mxu0 0
    %651 = vmatpush.bf16.msra.mxu0 0
    %652 = vmatpush.bf16.msra.mxu0 0
    %653 = vmatpush.bf16.msra.mxu0 0
    %654 = vmatpush.bf16.msra.mxu0 %v642
    %655 = vmatpush.bf16.msra.mxu0 %v641
    %656 = vmatmul.bf16.gmra.mxu0 %v646
    %v657 = vpop.f32.mrf.mxu0
    %v658 = vadd.f32 %v636, %v657
    %v659 = vpop.f32.mrf.mxu0
    %v660 = vadd.f32 %v636, %v659
    %661 = vdwg.mxu0
    %v662 = vmul.f32 %v658, 0.5
    %v663 = vmul.f32 %v660, 0.5
    %v664 = vmul.f32 %v658, 0.044715
    %v665 = vmul.f32 %v660, 0.044715
    %v666 = vmul.f32 %v664, %v658
    %v667 = vmul.f32 %v665, %v660
    %v668 = vmul.f32 %v666, %v658
    %v669 = vmul.f32 %v667, %v660
    %v670 = vadd.f32 %v658, %v668
    %v671 = vadd.f32 %v660, %v669
    %v672 = vmul.f32 %v670, 0.7978846
    %v673 = vmul.f32 %v671, 0.7978846
    %v674 = vtanh.pop %v672
    %v675 = vtanh.pop %v673
    %v676 = vadd.f32 %v674, 1.0
    %v677 = vadd.f32 %v675, 1.0
    %v678 = vmul.f32 %v662, %v676
    %v679 = vmul.f32 %v663, %v677
    %v680 = vpack.c.bf16 %v679, %v678
    %v681 = vld [vmem:[%s5] sm:$0xf]
    %v682 = vld [vmem:[%s5 + $0x4] sm:$0xf]
    %v683 = vld [vmem:[%s5 + $0x8] sm:$0xf]
    %v684 = vld [vmem:[%s5 + $0xc] sm:$0xf]
    %v685 = vld [vmem:[%s5 + $0x10] sm:$0xf]
    %v686 = vld [vmem:[%s5 + $0x14] sm:$0xf]
    %v687 = vld [vmem:[%s5 + $0x18] sm:$0xf]
    %v688 = vld [vmem:[%s5 + $0x1c] sm:$0xf]
    %v689 = vld [vmem:[%s5 + $0x20] sm:$0xf]
    %v690 = vld [vmem:[%s5 + $0x24] sm:$0xf]
    %v691 = vld [vmem:[%s5 + $0x28] sm:$0xf]
    %v692 = vld [vmem:[%s5 + $0x2c] sm:$0xf]
    %v693 = vld [vmem:[%s5 + $0x30] sm:$0xf]
    %v694 = vld [vmem:[%s5 + $0x34] sm:$0xf]
    %v695 = vld [vmem:[%s5 + $0x38] sm:$0xf]
    %v696 = vld [vmem:[%s5 + $0x3c] sm:$0xf]
    %v697 = vld [vmem:[%s6 + $0x7] sm:$0x1]
    %v698 = vperm.slane %v697, 0
    %v715 = vunpack.c.l.b16 %v681
    %v716 = vunpack.c.l.b16 %v682
    %v717 = vunpack.c.l.b16 %v683
    %v718 = vunpack.c.l.b16 %v684
    %v719 = vunpack.c.l.b16 %v685
    %v720 = vunpack.c.l.b16 %v686
    %v721 = vunpack.c.l.b16 %v687
    %v722 = vunpack.c.l.b16 %v688
    %v723 = vunpack.c.l.b16 %v689
    %v724 = vunpack.c.l.b16 %v690
    %v725 = vunpack.c.l.b16 %v691
    %v726 = vunpack.c.l.b16 %v692
    %v727 = vunpack.c.l.b16 %v693
    %v728 = vunpack.c.l.b16 %v694
    %v729 = vunpack.c.l.b16 %v695
    %v730 = vunpack.c.l.b16 %v696
    %v731 = vpack.c.b16 %v716, %v715
    %v732 = vpack.c.b16 %v718, %v717
    %v733 = vpack.c.b16 %v720, %v719
    %v734 = vpack.c.b16 %v722, %v721
    %v735 = vpack.c.b16 %v724, %v723
    %v736 = vpack.c.b16 %v726, %v725
    %v737 = vpack.c.b16 %v728, %v727
    %v738 = vpack.c.b16 %v730, %v729
    %747 = vmatpush.bf16.msra.mxu0 %v738
    %748 = vmatpush.bf16.msra.mxu0 %v737
    %749 = vmatpush.bf16.msra.mxu0 %v736
    %750 = vmatpush.bf16.msra.mxu0 %v735
    %751 = vmatpush.bf16.msra.mxu0 %v734
    %752 = vmatpush.bf16.msra.mxu0 %v733
    %753 = vmatpush.bf16.msra.mxu0 %v732
    %754 = vmatpush.bf16.msra.mxu0 %v731
    %755 = vmatmul.bf16.gmra.mxu0 %v680
    %v756 = vpop.f32.mrf.mxu0
    %v757 = vadd.f32 %v698, %v756
    %v758 = vpop.f32.mrf.mxu0
    %v759 = vadd.f32 %v698, %v758
    %760 = vdwg.mxu0
    %v761 = vadd.f32 %v757, %v632
    %v762 = vadd.f32 %v759, %v633
    %v763 = vld [vmem:[%s6 + $0x8] sm:$0x1]
    %v764 = vld [vmem:[%s6 + $0x9] sm:$0x1]
    %v765 = vsel %vm128, %v761, 0.0
    %766 = vadd.xlane.f32.xlu0 %v765
    %v767 = vpop.xlane.xlu0 %766
    %v768 = vsel %vm128, %v762, 0.0
    %769 = vadd.xlane.f32.xlu0 %v768
    %v770 = vpop.xlane.xlu0 %769
    %v771 = vmul.f32 %v767, %v141
    %v772 = vmul.f32 %v770, %v141
    %v773 = vsub.f32 %v761, %v771
    %v774 = vsub.f32 %v762, %v772
    %v775 = vmul.f32 %v773, %v773
    %v776 = vmul.f32 %v774, %v774
    %v777 = vsel %vm128, %v775, 0.0
    %778 = vadd.xlane.f32.xlu0 %v777
    %v779 = vpop.xlane.xlu0 %778
    %v780 = vsel %vm128, %v776, 0.0
    %781 = vadd.xlane.f32.xlu0 %v780
    %v782 = vpop.xlane.xlu0 %781
    %v783 = vmul.f32 %v779, %v141
    %v784 = vmul.f32 %v782, %v141
    %v785 = vadd.f32 %v783, 1e-12
    %v786 = vadd.f32 %v784, 1e-12
    %v787 = vrsqrt.pop %v785
    %v788 = vmul.f32 %v787, %v785
    %v789 = vmul.f32 %v788, %v787
    %v790 = vmul.f32 0.5, %v789
    %v791 = vsub.f32 1.5, %v790
    %v792 = vmul.f32 %v787, %v791
    %vm793 = vweird.f32 %v785
    %vm794 = vweird.f32 %v787
    %vm795 = vmor %vm793, %vm794
    %v796 = vsel %vm795, %v787, %v792
    %v797 = vrsqrt.pop %v786
    %v798 = vmul.f32 %v797, %v786
    %v799 = vmul.f32 %v798, %v797
    %v800 = vmul.f32 0.5, %v799
    %v801 = vsub.f32 1.5, %v800
    %v802 = vmul.f32 %v797, %v801
    %vm803 = vweird.f32 %v786
    %vm804 = vweird.f32 %v797
    %vm805 = vmor %vm803, %vm804
    %v806 = vsel %vm805, %v797, %v802
    %v807 = vmul.f32 %v773, %v796
    %v808 = vmul.f32 %v774, %v806
    %v809 = vperm.slane %v763, 0
    %v810 = vmul.f32 %v807, %v809
    %v811 = vmul.f32 %v808, %v809
    %v812 = vperm.slane %v764, 0
    %v813 = vadd.f32 %v810, %v812
    %v814 = vadd.f32 %v811, %v812
    %s815 = scalar_lea.vmem %s4, 32
    %v816 = vld [vmem:[%s815] sm:$0xff]
    %v817 = vld [vmem:[%s815 + $0x8] sm:$0xff]
    %v818 = vld [vmem:[%s815 + $0x10] sm:$0xff]
    %v819 = vld [vmem:[%s815 + $0x18] sm:$0xff]
    %v820 = vpack.c.bf16 %v814, %v813
    %v821 = vld [vmem:[%s6 + $0xa] sm:$0x1]
    %v822 = vperm.slane %v821, 0
    %v827 = vunpack.c.l.b16 %v816
    %v828 = vunpack.c.l.b16 %v817
    %v829 = vunpack.c.l.b16 %v818
    %v830 = vunpack.c.l.b16 %v819
    %v831 = vpack.c.b16 %v828, %v827
    %v832 = vpack.c.b16 %v830, %v829
    %v836 = vsel %vm128, %v820, 0
    %838 = vmatpush.bf16.msra.mxu0 0
    %839 = vmatpush.bf16.msra.mxu0 0
    %840 = vmatpush.bf16.msra.mxu0 0
    %841 = vmatpush.bf16.msra.mxu0 0
    %842 = vmatpush.bf16.msra.mxu0 0
    %843 = vmatpush.bf16.msra.mxu0 0
    %844 = vmatpush.bf16.msra.mxu0 %v832
    %845 = vmatpush.bf16.msra.mxu0 %v831
    %846 = vmatmul.bf16.gmra.mxu0 %v836
    %v847 = vpop.f32.mrf.mxu0
    %v848 = vadd.f32 %v822, %v847
    %v849 = vpop.f32.mrf.mxu0
    %v850 = vadd.f32 %v822, %v849
    %851 = vdwg.mxu0
    %853 = vrot.lane.b32.xlu0 %v848, 96
    %v854 = vpop.permute.xlu0 %853
    %v855 = vsel %vm229, %v848, 0
    %v857 = vsel %vm229, %v854, 0
    %859 = vmatpush.xpose.msra.mxu0 0.0
    %860 = vmatpush.xpose.msra.mxu0 0.0
    %861 = vmatpush.xpose.msra.mxu0 0.0
    %862 = vmatpush.xpose.msra.mxu0 0.0
    %863 = vmatpush.xpose.msra.mxu0 0.0
    %864 = vmatpush.xpose.msra.mxu0 0.0
    %865 = vmatpush.xpose.msra.mxu0 0.0
    %866 = vmatpush.xpose.msra.mxu0 0.0
    %867 = vmatpush.xpose.msra.mxu0 0.0
    %868 = vmatpush.xpose.msra.mxu0 0.0
    %869 = vmatpush.xpose.msra.mxu0 0.0
    %870 = vmatpush.xpose.msra.mxu0 0.0
    %871 = vmatpush.xpose.msra.mxu0 0.0
    %872 = vmatpush.xpose.msra.mxu0 0.0
    %873 = vmatpush.xpose.msra.mxu0 0.0
    %874 = vmatpush.xpose.msra.mxu0 %v857
    %875 = vmatmul.f32.gmra.mxu0 %v855
    %v876 = vpop.f32.mrf.mxu0
    %v877 = vadd.f32 %v225, %v876
    %878 = vdwg.mxu0
    %v879 = vsel %vm254, %v877, -inf
    %880 = vmax.xlane.f32.xlu0 %v879
    %v881 = vpop.xlane.xlu0 %880
    %v882 = vsub.f32 %v877, %v881
    %v883 = vmul.f32 %v882, 1.442695
    %v884 = vpow.pop %v883
    %v885 = vsel %vm254, %v884, 0.0
    %886 = vadd.xlane.f32.xlu0 %v885
    %v887 = vpop.xlane.xlu0 %886
    %v888 = vrcp.pop %v887
    %v889 = vmul.f32 %v887, %v888
    %v890 = vsub.f32 1.0, %v889
    %v891 = vmul.f32 %v888, %v890
    %v892 = vadd.f32 %v888, %v891
    %vm893 = vweird.f32 %v887
    %vm894 = vweird.f32 %v888
    %vm895 = vmor %vm893, %vm894
    %v896 = vsel %vm895, %v888, %v892
    %v897 = vand.u32 2147483647, %v887
    %vm898 = vcmp.eq.f32.partialorder %v897, 8.507059e+37
    %v899 = vand.u32 %v887, 2147483648
    %v900 = vor.u32 1.1754944e-38, %v899
    %v901 = vsel %vm898, %v900, %v896
    %v902 = vmul.f32 %v884, %v901
    %903 = vrot.lane.b32.xlu0 %v848, 64
    %v904 = vpop.permute.xlu0 %903
    %v907 = vsel %vm254, %v902, 0
    %909 = vmatpush.msra.mxu0 0.0
    %910 = vmatpush.msra.mxu0 0.0
    %911 = vmatpush.msra.mxu0 0.0
    %912 = vmatpush.msra.mxu0 0.0
    %913 = vmatpush.msra.mxu0 0.0
    %914 = vmatpush.msra.mxu0 0.0
    %915 = vmatpush.msra.mxu0 0.0
    %916 = vmatpush.msra.mxu0 0.0
    %917 = vmatpush.msra.mxu0 0.0
    %918 = vmatpush.msra.mxu0 0.0
    %919 = vmatpush.msra.mxu0 0.0
    %920 = vmatpush.msra.mxu0 0.0
    %921 = vmatpush.msra.mxu0 0.0
    %922 = vmatpush.msra.mxu0 0.0
    %923 = vmatpush.msra.mxu0 0.0
    %924 = vmatpush.msra.mxu0 %v904
    %925 = vmatmul.f32.gmra.mxu0 %v907
    %v926 = vpop.f32.mrf.mxu0
    %v927 = vadd.f32 0.0, %v926
    %928 = vdwg.mxu0
    %929 = vst.msk [vmem:[#allocation2] sm:$0xff] %vm229, %v927
    %930 = vrot.lane.b32.xlu0 %v848, 112
    %v931 = vpop.permute.xlu0 %930
    %932 = vrot.lane.b32.xlu0 %v848, 80
    %v933 = vpop.permute.xlu0 %932
    %v934 = vsel %vm229, %v931, 0
    %v936 = vsel %vm229, %v933, 0
    %938 = vmatpush.xpose.msra.mxu0 0.0
    %939 = vmatpush.xpose.msra.mxu0 0.0
    %940 = vmatpush.xpose.msra.mxu0 0.0
    %941 = vmatpush.xpose.msra.mxu0 0.0
    %942 = vmatpush.xpose.msra.mxu0 0.0
    %943 = vmatpush.xpose.msra.mxu0 0.0
    %944 = vmatpush.xpose.msra.mxu0 0.0
    %945 = vmatpush.xpose.msra.mxu0 0.0
    %946 = vmatpush.xpose.msra.mxu0 0.0
    %947 = vmatpush.xpose.msra.mxu0 0.0
    %948 = vmatpush.xpose.msra.mxu0 0.0
    %949 = vmatpush.xpose.msra.mxu0 0.0
    %950 = vmatpush.xpose.msra.mxu0 0.0
    %951 = vmatpush.xpose.msra.mxu0 0.0
    %952 = vmatpush.xpose.msra.mxu0 0.0
    %953 = vmatpush.xpose.msra.mxu0 %v936
    %954 = vmatmul.f32.gmra.mxu0 %v934
    %v955 = vpop.f32.mrf.mxu0
    %v956 = vadd.f32 %v225, %v955
    %957 = vdwg.mxu0
    %v958 = vsel %vm254, %v956, -inf
    %959 = vmax.xlane.f32.xlu0 %v958
    %v960 = vpop.xlane.xlu0 %959
    %v961 = vsub.f32 %v956, %v960
    %v962 = vmul.f32 %v961, 1.442695
    %v963 = vpow.pop %v962
    %v964 = vsel %vm254, %v963, 0.0
    %965 = vadd.xlane.f32.xlu0 %v964
    %v966 = vpop.xlane.xlu0 %965
    %v967 = vrcp.pop %v966
    %v968 = vmul.f32 %v966, %v967
    %v969 = vsub.f32 1.0, %v968
    %v970 = vmul.f32 %v967, %v969
    %v971 = vadd.f32 %v967, %v970
    %vm972 = vweird.f32 %v966
    %vm973 = vweird.f32 %v967
    %vm974 = vmor %vm972, %vm973
    %v975 = vsel %vm974, %v967, %v971
    %v976 = vand.u32 2147483647, %v966
    %vm977 = vcmp.eq.f32.partialorder %v976, 8.507059e+37
    %v978 = vand.u32 %v966, 2147483648
    %v979 = vor.u32 1.1754944e-38, %v978
    %v980 = vsel %vm977, %v979, %v975
    %v981 = vmul.f32 %v963, %v980
    %982 = vrot.lane.b32.xlu0 %v848, 48
    %v983 = vpop.permute.xlu0 %982
    %v986 = vsel %vm254, %v981, 0
    %988 = vmatpush.msra.mxu0 0.0
    %989 = vmatpush.msra.mxu0 0.0
    %990 = vmatpush.msra.mxu0 0.0
    %991 = vmatpush.msra.mxu0 0.0
    %992 = vmatpush.msra.mxu0 0.0
    %993 = vmatpush.msra.mxu0 0.0
    %994 = vmatpush.msra.mxu0 0.0
    %995 = vmatpush.msra.mxu0 0.0
    %996 = vmatpush.msra.mxu0 0.0
    %997 = vmatpush.msra.mxu0 0.0
    %998 = vmatpush.msra.mxu0 0.0
    %999 = vmatpush.msra.mxu0 0.0
    %1000 = vmatpush.msra.mxu0 0.0
    %1001 = vmatpush.msra.mxu0 0.0
    %1002 = vmatpush.msra.mxu0 0.0
    %1003 = vmatpush.msra.mxu0 %v983
    %1004 = vmatmul.f32.gmra.mxu0 %v986
    %v1005 = vpop.f32.mrf.mxu0
    %v1006 = vadd.f32 0.0, %v1005
    %1007 = vdwg.mxu0
    %1009 = vrot.lane.b32.xlu0 %v1006, 16
    %v1010 = vpop.permute.xlu0 %1009
    %1012 = vst.msk [vmem:[#allocation2] sm:$0xff] %vm388, %v1010
    %1014 = vrot.lane.b32.xlu0 %v850, 96
    %v1015 = vpop.permute.xlu0 %1014
    %v1016 = vsel %vm229, %v850, 0
    %v1018 = vsel %vm229, %v1015, 0
    %1020 = vmatpush.xpose.msra.mxu0 0.0
    %1021 = vmatpush.xpose.msra.mxu0 0.0
    %1022 = vmatpush.xpose.msra.mxu0 0.0
    %1023 = vmatpush.xpose.msra.mxu0 0.0
    %1024 = vmatpush.xpose.msra.mxu0 0.0
    %1025 = vmatpush.xpose.msra.mxu0 0.0
    %1026 = vmatpush.xpose.msra.mxu0 0.0
    %1027 = vmatpush.xpose.msra.mxu0 0.0
    %1028 = vmatpush.xpose.msra.mxu0 0.0
    %1029 = vmatpush.xpose.msra.mxu0 0.0
    %1030 = vmatpush.xpose.msra.mxu0 0.0
    %1031 = vmatpush.xpose.msra.mxu0 0.0
    %1032 = vmatpush.xpose.msra.mxu0 0.0
    %1033 = vmatpush.xpose.msra.mxu0 0.0
    %1034 = vmatpush.xpose.msra.mxu0 0.0
    %1035 = vmatpush.xpose.msra.mxu0 %v1018
    %1036 = vmatmul.f32.gmra.mxu0 %v1016
    %v1037 = vpop.f32.mrf.mxu0
    %v1038 = vadd.f32 %v390, %v1037
    %1039 = vdwg.mxu0
    %v1040 = vsel %vm254, %v1038, -inf
    %1041 = vmax.xlane.f32.xlu0 %v1040
    %v1042 = vpop.xlane.xlu0 %1041
    %v1043 = vsub.f32 %v1038, %v1042
    %v1044 = vmul.f32 %v1043, 1.442695
    %v1045 = vpow.pop %v1044
    %v1046 = vsel %vm254, %v1045, 0.0
    %1047 = vadd.xlane.f32.xlu0 %v1046
    %v1048 = vpop.xlane.xlu0 %1047
    %v1049 = vrcp.pop %v1048
    %v1050 = vmul.f32 %v1048, %v1049
    %v1051 = vsub.f32 1.0, %v1050
    %v1052 = vmul.f32 %v1049, %v1051
    %v1053 = vadd.f32 %v1049, %v1052
    %vm1054 = vweird.f32 %v1048
    %vm1055 = vweird.f32 %v1049
    %vm1056 = vmor %vm1054, %vm1055
    %v1057 = vsel %vm1056, %v1049, %v1053
    %v1058 = vand.u32 2147483647, %v1048
    %vm1059 = vcmp.eq.f32.partialorder %v1058, 8.507059e+37
    %v1060 = vand.u32 %v1048, 2147483648
    %v1061 = vor.u32 1.1754944e-38, %v1060
    %v1062 = vsel %vm1059, %v1061, %v1057
    %v1063 = vmul.f32 %v1045, %v1062
    %1064 = vrot.lane.b32.xlu0 %v850, 64
    %v1065 = vpop.permute.xlu0 %1064
    %v1068 = vsel %vm254, %v1063, 0
    %1070 = vmatpush.msra.mxu0 0.0
    %1071 = vmatpush.msra.mxu0 0.0
    %1072 = vmatpush.msra.mxu0 0.0
    %1073 = vmatpush.msra.mxu0 0.0
    %1074 = vmatpush.msra.mxu0 0.0
    %1075 = vmatpush.msra.mxu0 0.0
    %1076 = vmatpush.msra.mxu0 0.0
    %1077 = vmatpush.msra.mxu0 0.0
    %1078 = vmatpush.msra.mxu0 0.0
    %1079 = vmatpush.msra.mxu0 0.0
    %1080 = vmatpush.msra.mxu0 0.0
    %1081 = vmatpush.msra.mxu0 0.0
    %1082 = vmatpush.msra.mxu0 0.0
    %1083 = vmatpush.msra.mxu0 0.0
    %1084 = vmatpush.msra.mxu0 0.0
    %1085 = vmatpush.msra.mxu0 %v1065
    %1086 = vmatmul.f32.gmra.mxu0 %v1068
    %v1087 = vpop.f32.mrf.mxu0
    %v1088 = vadd.f32 0.0, %v1087
    %1089 = vdwg.mxu0
    %1090 = vst.msk [vmem:[#allocation2 + $0x8] sm:$0xff] %vm229, %v1088
    %1091 = vrot.lane.b32.xlu0 %v850, 112
    %v1092 = vpop.permute.xlu0 %1091
    %1093 = vrot.lane.b32.xlu0 %v850, 80
    %v1094 = vpop.permute.xlu0 %1093
    %v1095 = vsel %vm229, %v1092, 0
    %v1097 = vsel %vm229, %v1094, 0
    %1099 = vmatpush.xpose.msra.mxu0 0.0
    %1100 = vmatpush.xpose.msra.mxu0 0.0
    %1101 = vmatpush.xpose.msra.mxu0 0.0
    %1102 = vmatpush.xpose.msra.mxu0 0.0
    %1103 = vmatpush.xpose.msra.mxu0 0.0
    %1104 = vmatpush.xpose.msra.mxu0 0.0
    %1105 = vmatpush.xpose.msra.mxu0 0.0
    %1106 = vmatpush.xpose.msra.mxu0 0.0
    %1107 = vmatpush.xpose.msra.mxu0 0.0
    %1108 = vmatpush.xpose.msra.mxu0 0.0
    %1109 = vmatpush.xpose.msra.mxu0 0.0
    %1110 = vmatpush.xpose.msra.mxu0 0.0
    %1111 = vmatpush.xpose.msra.mxu0 0.0
    %1112 = vmatpush.xpose.msra.mxu0 0.0
    %1113 = vmatpush.xpose.msra.mxu0 0.0
    %1114 = vmatpush.xpose.msra.mxu0 %v1097
    %1115 = vmatmul.f32.gmra.mxu0 %v1095
    %v1116 = vpop.f32.mrf.mxu0
    %v1117 = vadd.f32 %v390, %v1116
    %1118 = vdwg.mxu0
    %v1119 = vsel %vm254, %v1117, -inf
    %1120 = vmax.xlane.f32.xlu0 %v1119
    %v1121 = vpop.xlane.xlu0 %1120
    %v1122 = vsub.f32 %v1117, %v1121
    %v1123 = vmul.f32 %v1122, 1.442695
    %v1124 = vpow.pop %v1123
    %v1125 = vsel %vm254, %v1124, 0.0
    %1126 = vadd.xlane.f32.xlu0 %v1125
    %v1127 = vpop.xlane.xlu0 %1126
    %v1128 = vrcp.pop %v1127
    %v1129 = vmul.f32 %v1127, %v1128
    %v1130 = vsub.f32 1.0, %v1129
    %v1131 = vmul.f32 %v1128, %v1130
    %v1132 = vadd.f32 %v1128, %v1131
    %vm1133 = vweird.f32 %v1127
    %vm1134 = vweird.f32 %v1128
    %vm1135 = vmor %vm1133, %vm1134
    %v1136 = vsel %vm1135, %v1128, %v1132
    %v1137 = vand.u32 2147483647, %v1127
    %vm1138 = vcmp.eq.f32.partialorder %v1137, 8.507059e+37
    %v1139 = vand.u32 %v1127, 2147483648
    %v1140 = vor.u32 1.1754944e-38, %v1139
    %v1141 = vsel %vm1138, %v1140, %v1136
    %v1142 = vmul.f32 %v1124, %v1141
    %1143 = vrot.lane.b32.xlu0 %v850, 48
    %v1144 = vpop.permute.xlu0 %1143
    %v1147 = vsel %vm254, %v1142, 0
    %1149 = vmatpush.msra.mxu0 0.0
    %1150 = vmatpush.msra.mxu0 0.0
    %1151 = vmatpush.msra.mxu0 0.0
    %1152 = vmatpush.msra.mxu0 0.0
    %1153 = vmatpush.msra.mxu0 0.0
    %1154 = vmatpush.msra.mxu0 0.0
    %1155 = vmatpush.msra.mxu0 0.0
    %1156 = vmatpush.msra.mxu0 0.0
    %1157 = vmatpush.msra.mxu0 0.0
    %1158 = vmatpush.msra.mxu0 0.0
    %1159 = vmatpush.msra.mxu0 0.0
    %1160 = vmatpush.msra.mxu0 0.0
    %1161 = vmatpush.msra.mxu0 0.0
    %1162 = vmatpush.msra.mxu0 0.0
    %1163 = vmatpush.msra.mxu0 0.0
    %1164 = vmatpush.msra.mxu0 %v1144
    %1165 = vmatmul.f32.gmra.mxu0 %v1147
    %v1166 = vpop.f32.mrf.mxu0
    %v1167 = vadd.f32 0.0, %v1166
    %1168 = vdwg.mxu0
    %1170 = vrot.lane.b32.xlu0 %v1167, 16
    %v1171 = vpop.permute.xlu0 %1170
    %1173 = vst.msk [vmem:[#allocation2 + $0x8] sm:$0xff] %vm388, %v1171
    %v1174 = vld [vmem:[#allocation2] sm:$0xff]
    %v1175 = vld [vmem:[#allocation2 + $0x8] sm:$0xff]
    %v1176 = vpack.c.bf16 %v1175, %v1174
    %v1177 = vld [vmem:[%s6 + $0xb] sm:$0x1]
    %v1178 = vperm.slane %v1177, 0
    %1179 = vrot.lane.b32.xlu0 %v831, 32
    %v1180 = vpop.permute.xlu0 %1179
    %1181 = vrot.lane.b32.xlu0 %v832, 32
    %v1182 = vpop.permute.xlu0 %1181
    %v1186 = vsel %vm128, %v1176, 0
    %1188 = vmatpush.bf16.msra.mxu0 0
    %1189 = vmatpush.bf16.msra.mxu0 0
    %1190 = vmatpush.bf16.msra.mxu0 0
    %1191 = vmatpush.bf16.msra.mxu0 0
    %1192 = vmatpush.bf16.msra.mxu0 0
    %1193 = vmatpush.bf16.msra.mxu0 0
    %1194 = vmatpush.bf16.msra.mxu0 %v1182
    %1195 = vmatpush.bf16.msra.mxu0 %v1180
    %1196 = vmatmul.bf16.gmra.mxu0 %v1186
    %v1197 = vpop.f32.mrf.mxu0
    %v1198 = vadd.f32 %v1178, %v1197
    %v1199 = vpop.f32.mrf.mxu0
    %v1200 = vadd.f32 %v1178, %v1199
    %1201 = vdwg.mxu0
    %v1202 = vadd.f32 %v1198, %v813
    %v1203 = vadd.f32 %v1200, %v814
    %v1204 = vld [vmem:[%s6 + $0xc] sm:$0x1]
    %v1205 = vld [vmem:[%s6 + $0xd] sm:$0x1]
    %v1206 = vsel %vm128, %v1202, 0.0
    %1207 = vadd.xlane.f32.xlu0 %v1206
    %v1208 = vpop.xlane.xlu0 %1207
    %v1209 = vsel %vm128, %v1203, 0.0
    %1210 = vadd.xlane.f32.xlu0 %v1209
    %v1211 = vpop.xlane.xlu0 %1210
    %v1212 = vmul.f32 %v1208, %v141
    %v1213 = vmul.f32 %v1211, %v141
    %v1214 = vsub.f32 %v1202, %v1212
    %v1215 = vsub.f32 %v1203, %v1213
    %v1216 = vmul.f32 %v1214, %v1214
    %v1217 = vmul.f32 %v1215, %v1215
    %v1218 = vsel %vm128, %v1216, 0.0
    %1219 = vadd.xlane.f32.xlu0 %v1218
    %v1220 = vpop.xlane.xlu0 %1219
    %v1221 = vsel %vm128, %v1217, 0.0
    %1222 = vadd.xlane.f32.xlu0 %v1221
    %v1223 = vpop.xlane.xlu0 %1222
    %v1224 = vmul.f32 %v1220, %v141
    %v1225 = vmul.f32 %v1223, %v141
    %v1226 = vadd.f32 %v1224, 1e-12
    %v1227 = vadd.f32 %v1225, 1e-12
    %v1228 = vrsqrt.pop %v1226
    %v1229 = vmul.f32 %v1228, %v1226
    %v1230 = vmul.f32 %v1229, %v1228
    %v1231 = vmul.f32 0.5, %v1230
    %v1232 = vsub.f32 1.5, %v1231
    %v1233 = vmul.f32 %v1228, %v1232
    %vm1234 = vweird.f32 %v1226
    %vm1235 = vweird.f32 %v1228
    %vm1236 = vmor %vm1234, %vm1235
    %v1237 = vsel %vm1236, %v1228, %v1233
    %v1238 = vrsqrt.pop %v1227
    %v1239 = vmul.f32 %v1238, %v1227
    %v1240 = vmul.f32 %v1239, %v1238
    %v1241 = vmul.f32 0.5, %v1240
    %v1242 = vsub.f32 1.5, %v1241
    %v1243 = vmul.f32 %v1238, %v1242
    %vm1244 = vweird.f32 %v1227
    %vm1245 = vweird.f32 %v1238
    %vm1246 = vmor %vm1244, %vm1245
    %v1247 = vsel %vm1246, %v1238, %v1243
    %v1248 = vmul.f32 %v1214, %v1237
    %v1249 = vmul.f32 %v1215, %v1247
    %v1250 = vperm.slane %v1204, 0
    %v1251 = vmul.f32 %v1248, %v1250
    %v1252 = vmul.f32 %v1249, %v1250
    %v1253 = vperm.slane %v1205, 0
    %v1254 = vadd.f32 %v1251, %v1253
    %v1255 = vadd.f32 %v1252, %v1253
    %v1256 = vpack.c.bf16 %v1255, %v1254
    %v1257 = vld [vmem:[%s6 + $0xe] sm:$0x1]
    %v1258 = vperm.slane %v1257, 0
    %v1259 = vunpack.c.h.b16 %v816
    %v1260 = vunpack.c.h.b16 %v817
    %v1261 = vunpack.c.h.b16 %v818
    %v1262 = vunpack.c.h.b16 %v819
    %v1263 = vpack.c.b16 %v1260, %v1259
    %v1264 = vpack.c.b16 %v1262, %v1261
    %v1268 = vsel %vm128, %v1256, 0
    %1270 = vmatpush.bf16.msra.mxu0 0
    %1271 = vmatpush.bf16.msra.mxu0 0
    %1272 = vmatpush.bf16.msra.mxu0 0
    %1273 = vmatpush.bf16.msra.mxu0 0
    %1274 = vmatpush.bf16.msra.mxu0 0
    %1275 = vmatpush.bf16.msra.mxu0 0
    %1276 = vmatpush.bf16.msra.mxu0 %v1264
    %1277 = vmatpush.bf16.msra.mxu0 %v1263
    %1278 = vmatmul.bf16.gmra.mxu0 %v1268
    %v1279 = vpop.f32.mrf.mxu0
    %v1280 = vadd.f32 %v1258, %v1279
    %v1281 = vpop.f32.mrf.mxu0
    %v1282 = vadd.f32 %v1258, %v1281
    %1283 = vdwg.mxu0
    %v1284 = vmul.f32 %v1280, 0.5
    %v1285 = vmul.f32 %v1282, 0.5
    %v1286 = vmul.f32 %v1280, 0.044715
    %v1287 = vmul.f32 %v1282, 0.044715
    %v1288 = vmul.f32 %v1286, %v1280
    %v1289 = vmul.f32 %v1287, %v1282
    %v1290 = vmul.f32 %v1288, %v1280
    %v1291 = vmul.f32 %v1289, %v1282
    %v1292 = vadd.f32 %v1280, %v1290
    %v1293 = vadd.f32 %v1282, %v1291
    %v1294 = vmul.f32 %v1292, 0.7978846
    %v1295 = vmul.f32 %v1293, 0.7978846
    %v1296 = vtanh.pop %v1294
    %v1297 = vtanh.pop %v1295
    %v1298 = vadd.f32 %v1296, 1.0
    %v1299 = vadd.f32 %v1297, 1.0
    %v1300 = vmul.f32 %v1284, %v1298
    %v1301 = vmul.f32 %v1285, %v1299
    %v1302 = vpack.c.bf16 %v1301, %v1300
    %s1303 = scalar_lea.vmem %s5, 64
    %v1304 = vld [vmem:[%s1303] sm:$0xf]
    %v1305 = vld [vmem:[%s1303 + $0x4] sm:$0xf]
    %v1306 = vld [vmem:[%s1303 + $0x8] sm:$0xf]
    %v1307 = vld [vmem:[%s1303 + $0xc] sm:$0xf]
    %v1308 = vld [vmem:[%s1303 + $0x10] sm:$0xf]
    %v1309 = vld [vmem:[%s1303 + $0x14] sm:$0xf]
    %v1310 = vld [vmem:[%s1303 + $0x18] sm:$0xf]
    %v1311 = vld [vmem:[%s1303 + $0x1c] sm:$0xf]
    %v1312 = vld [vmem:[%s1303 + $0x20] sm:$0xf]
    %v1313 = vld [vmem:[%s1303 + $0x24] sm:$0xf]
    %v1314 = vld [vmem:[%s1303 + $0x28] sm:$0xf]
    %v1315 = vld [vmem:[%s1303 + $0x2c] sm:$0xf]
    %v1316 = vld [vmem:[%s1303 + $0x30] sm:$0xf]
    %v1317 = vld [vmem:[%s1303 + $0x34] sm:$0xf]
    %v1318 = vld [vmem:[%s1303 + $0x38] sm:$0xf]
    %v1319 = vld [vmem:[%s1303 + $0x3c] sm:$0xf]
    %v1320 = vld [vmem:[%s6 + $0xf] sm:$0x1]
    %v1321 = vperm.slane %v1320, 0
    %v1338 = vunpack.c.l.b16 %v1304
    %v1339 = vunpack.c.l.b16 %v1305
    %v1340 = vunpack.c.l.b16 %v1306
    %v1341 = vunpack.c.l.b16 %v1307
    %v1342 = vunpack.c.l.b16 %v1308
    %v1343 = vunpack.c.l.b16 %v1309
    %v1344 = vunpack.c.l.b16 %v1310
    %v1345 = vunpack.c.l.b16 %v1311
    %v1346 = vunpack.c.l.b16 %v1312
    %v1347 = vunpack.c.l.b16 %v1313
    %v1348 = vunpack.c.l.b16 %v1314
    %v1349 = vunpack.c.l.b16 %v1315
    %v1350 = vunpack.c.l.b16 %v1316
    %v1351 = vunpack.c.l.b16 %v1317
    %v1352 = vunpack.c.l.b16 %v1318
    %v1353 = vunpack.c.l.b16 %v1319
    %v1354 = vpack.c.b16 %v1339, %v1338
    %v1355 = vpack.c.b16 %v1341, %v1340
    %v1356 = vpack.c.b16 %v1343, %v1342
    %v1357 = vpack.c.b16 %v1345, %v1344
    %v1358 = vpack.c.b16 %v1347, %v1346
    %v1359 = vpack.c.b16 %v1349, %v1348
    %v1360 = vpack.c.b16 %v1351, %v1350
    %v1361 = vpack.c.b16 %v1353, %v1352
    %1370 = vmatpush.bf16.msra.mxu0 %v1361
    %1371 = vmatpush.bf16.msra.mxu0 %v1360
    %1372 = vmatpush.bf16.msra.mxu0 %v1359
    %1373 = vmatpush.bf16.msra.mxu0 %v1358
    %1374 = vmatpush.bf16.msra.mxu0 %v1357
    %1375 = vmatpush.bf16.msra.mxu0 %v1356
    %1376 = vmatpush.bf16.msra.mxu0 %v1355
    %1377 = vmatpush.bf16.msra.mxu0 %v1354
    %1378 = vmatmul.bf16.gmra.mxu0 %v1302
    %v1379 = vpop.f32.mrf.mxu0
    %v1380 = vadd.f32 %v1321, %v1379
    %v1381 = vpop.f32.mrf.mxu0
    %v1382 = vadd.f32 %v1321, %v1381
    %1383 = vdwg.mxu0
    %v1384 = vadd.f32 %v1380, %v1254
    %v1385 = vadd.f32 %v1382, %v1255
    %v1386 = vld [vmem:[%s6 + $0x10] sm:$0x1]
    %v1387 = vld [vmem:[%s6 + $0x11] sm:$0x1]
    %v1388 = vsel %vm128, %v1384, 0.0
    %1389 = vadd.xlane.f32.xlu0 %v1388
    %v1390 = vpop.xlane.xlu0 %1389
    %v1391 = vsel %vm128, %v1385, 0.0
    %1392 = vadd.xlane.f32.xlu0 %v1391
    %v1393 = vpop.xlane.xlu0 %1392
    %v1394 = vmul.f32 %v1390, %v141
    %v1395 = vmul.f32 %v1393, %v141
    %v1396 = vsub.f32 %v1384, %v1394
    %v1397 = vsub.f32 %v1385, %v1395
    %v1398 = vmul.f32 %v1396, %v1396
    %v1399 = vmul.f32 %v1397, %v1397
    %v1400 = vsel %vm128, %v1398, 0.0
    %1401 = vadd.xlane.f32.xlu0 %v1400
    %v1402 = vpop.xlane.xlu0 %1401
    %v1403 = vsel %vm128, %v1399, 0.0
    %1404 = vadd.xlane.f32.xlu0 %v1403
    %v1405 = vpop.xlane.xlu0 %1404
    %v1406 = vmul.f32 %v1402, %v141
    %v1407 = vmul.f32 %v1405, %v141
    %v1408 = vadd.f32 %v1406, 1e-12
    %v1409 = vadd.f32 %v1407, 1e-12
    %v1410 = vrsqrt.pop %v1408
    %v1411 = vmul.f32 %v1410, %v1408
    %v1412 = vmul.f32 %v1411, %v1410
    %v1413 = vmul.f32 0.5, %v1412
    %v1414 = vsub.f32 1.5, %v1413
    %v1415 = vmul.f32 %v1410, %v1414
    %vm1416 = vweird.f32 %v1408
    %vm1417 = vweird.f32 %v1410
    %vm1418 = vmor %vm1416, %vm1417
    %v1419 = vsel %vm1418, %v1410, %v1415
    %v1420 = vrsqrt.pop %v1409
    %v1421 = vmul.f32 %v1420, %v1409
    %v1422 = vmul.f32 %v1421, %v1420
    %v1423 = vmul.f32 0.5, %v1422
    %v1424 = vsub.f32 1.5, %v1423
    %v1425 = vmul.f32 %v1420, %v1424
    %vm1426 = vweird.f32 %v1409
    %vm1427 = vweird.f32 %v1420
    %vm1428 = vmor %vm1426, %vm1427
    %v1429 = vsel %vm1428, %v1420, %v1425
    %v1430 = vmul.f32 %v1396, %v1419
    %v1431 = vmul.f32 %v1397, %v1429
    %v1432 = vperm.slane %v1386, 0
    %v1433 = vmul.f32 %v1430, %v1432
    %v1434 = vmul.f32 %v1431, %v1432
    %v1435 = vperm.slane %v1387, 0
    %v1436 = vadd.f32 %v1433, %v1435
    %v1437 = vadd.f32 %v1434, %v1435
    %s1438 = scalar_lea.vmem %s4, 64
    %v1439 = vld [vmem:[%s1438] sm:$0xff]
    %v1440 = vld [vmem:[%s1438 + $0x8] sm:$0xff]
    %v1441 = vld [vmem:[%s1438 + $0x10] sm:$0xff]
    %v1442 = vld [vmem:[%s1438 + $0x18] sm:$0xff]
    %v1443 = vpack.c.bf16 %v1436, %v1436
    %v1444 = vpack.c.bf16 %v1437, %v1437
    %v1445 = vld [vmem:[%s6 + $0x12] sm:$0x1]
    %v1446 = vperm.slane %v1445, 0
    %v1449 = vunpack.c.l.b16 %v1443
    %v1450 = vunpack.c.l.b16 %v1444
    %v1451 = vrot.slane %v1450, 7
    %vm1452 = vcmask 1041409
    %v1453 = vsel %vm1452, %v1451, %v1449
    %v1454 = vpack.c.b16 %v1453, %v1453
    %v1459 = vunpack.c.l.b16 %v1439
    %v1460 = vunpack.c.l.b16 %v1440
    %v1461 = vunpack.c.l.b16 %v1441
    %v1462 = vunpack.c.l.b16 %v1442
    %v1463 = vpack.c.b16 %v1460, %v1459
    %v1464 = vpack.c.b16 %v1462, %v1461
    %v1468 = vsel %vm128, %v1454, 0
    %1470 = vmatpush.bf16.msra.mxu0 0
    %1471 = vmatpush.bf16.msra.mxu0 0
    %1472 = vmatpush.bf16.msra.mxu0 0
    %1473 = vmatpush.bf16.msra.mxu0 0
    %1474 = vmatpush.bf16.msra.mxu0 0
    %1475 = vmatpush.bf16.msra.mxu0 0
    %1476 = vmatpush.bf16.msra.mxu0 %v1464
    %1477 = vmatpush.bf16.msra.mxu0 %v1463
    %1478 = vmatmul.bf16.gmra.mxu0 %v1468
    %v1479 = vpop.f32.mrf.mxu0
    %v1480 = vadd.f32 %v1446, %v1479
    %v1481 = vpop.f32.mrf.mxu0
    %1482 = vdwg.mxu0
    %v1483 = vtanh.pop %v1480
    %v1484 = vpack.c.bf16 %v1483, %v1483
    %v1485 = vld [vmem:[%s6 + $0x13] sm:$0x1]
    %v1486 = vperm.slane %v1485, 0
    %v1487 = vunpack.c.h.b16 %v1439
    %v1488 = vunpack.c.h.b16 %v1440
    %v1489 = vunpack.c.h.b16 %v1441
    %v1490 = vunpack.c.h.b16 %v1442
    %v1491 = vpack.c.b16 %v1488, %v1487
    %v1492 = vpack.c.b16 %v1490, %v1489
    %1493 = vrot.lane.b32.xlu0 %v1463, 96
    %v1494 = vpop.permute.xlu0 %1493
    %1495 = vrot.lane.b32.xlu0 %v1491, 96
    %v1496 = vpop.permute.xlu0 %1495
    %1497 = vrot.lane.b32.xlu0 %v1464, 96
    %v1498 = vpop.permute.xlu0 %1497
    %1499 = vrot.lane.b32.xlu0 %v1492, 96
    %v1500 = vpop.permute.xlu0 %1499
    %vm1501 = vcmask 785408
    %v1502 = vsel %vm1501, %v1494, %v1496
    %v1503 = vsel %vm1501, %v1498, %v1500
    %v1507 = vsel %vm128, %v1484, 0
    %1509 = vmatpush.bf16.msra.mxu0 0
    %1510 = vmatpush.bf16.msra.mxu0 0
    %1511 = vmatpush.bf16.msra.mxu0 0
    %1512 = vmatpush.bf16.msra.mxu0 0
    %1513 = vmatpush.bf16.msra.mxu0 0
    %1514 = vmatpush.bf16.msra.mxu0 0
    %1515 = vmatpush.bf16.msra.mxu0 %v1503
    %1516 = vmatpush.bf16.msra.mxu0 %v1502
    %1517 = vmatmul.bf16.gmra.mxu0 %v1507
    %v1518 = vpop.f32.mrf.mxu0
    %v1519 = vadd.f32 %v1486, %v1518
    %v1520 = vpop.f32.mrf.mxu0
    %1521 = vdwg.mxu0
    %vm1522 = vcmask 1041408
    %v1523 = vsel %vm1522, %v1519, -inf
    %1524 = vmax.xlane.f32.xlu0 %v1523
    %v1525 = vpop.xlane.xlu0 %1524
    %v1526 = vsub.f32 %v1519, %v1525
    %v1527 = vmul.f32 %v1526, 1.442695
    %v1528 = vpow.pop %v1527
    %v1529 = vsel %vm1522, %v1528, 0.0
    %1530 = vadd.xlane.f32.xlu0 %v1529
    %v1531 = vpop.xlane.xlu0 %1530
    %v1532 = vlog2.pop %v1531
    %v1533 = vmul.f32 %v1532, 0.6931472
    %v1534 = vsub.f32 %v1526, %v1533
    %1535 = vst [vmem:[#allocation3] sm:$0x3] %v1534
    // Predicated region
    $region30: #{my_model_forward.1} parent=1 // pred_check
      _
    $region31: #{my_model_forward.1} parent=1 // pred_check_branch
      %1537 = sbr.rel (0) target = $region33
    $region32: #{my_model_forward.1} parent=1 // pred_region
      %1539 = vsyncadd [#allocation4], 0
      %s1541 = sshll.u32 [#allocation3], 4
      %s1542 = int_to_ptr.vmem [resolvable:$true] %s1541
      %s1543 = sshll.u32 %s7, 4
      %s1544 = int_to_ptr.hbm [resolvable:$true] %s1543
      %1546 = dma.vmem_to_hbm [thread:$0]  %s1542, 32, %s1544, [#allocation4]
    $region33: #{my_model_forward.1} parent=1 // pred_fallthru
      _
    // Predicated region
    $region34: #{my_model_forward.1} parent=1 // pred_check
      _
    $region35: #{my_model_forward.1} parent=1 // pred_check_branch
      %1548 = sbr.rel (0) target = $region37
    $region36: #{my_model_forward.1} parent=1 // pred_region
      %1550 = dma.done [#allocation4], 32
    $region37: #{my_model_forward.1} parent=1 // pred_fallthru
      _
    %1551 = vsyncpa [#allocation4], 1

</llo_original>
